<compile_context>
chip_gen: v6e
topology: v6e:2x2x1
jax: 0.10.0
libtpu: 0.0.40
codegen_flags: <defaults>
</compile_context>

<pallas_src>
import jax
import jax.numpy as jnp
from jax.experimental import pallas as pl
from jax.experimental.pallas import tpu as pltpu

_HIGHEST = jax.lax.Precision.HIGHEST


def fm_kernel(b_ref, x_ref, vw_ref, s_ref, mq_ref, ml_ref, o_ref):
    """One batch tile of the factorization machine (lane-packed layout).

    b_ref : (1, 1)         bias, SMEM
    x_ref : (TBp, W)       packed x tile (f original rows per 128-lane packed row), streamed
    vw_ref: (W, f*(k+1))   block-diagonal [v | w] per packing slot, VMEM-resident
    s_ref : (W, f)         block-structured -0.5 * rowsum(v*v), VMEM-resident
    mq_ref: (f*(k+1), f)   0.5-selector of the k ip1 columns of each slot, VMEM-resident
    ml_ref: (f*(k+1), f)   1.0-selector of the linear column of each slot, VMEM-resident
    o_ref : (TBp, f)       output tile; [r, j] = prediction for original row r*f + j
    """
    x = x_ref[...]                                                     # (TBp, W) lane-dense
    bias = b_ref[0, 0]

    # One lane-dense MXU pass over the full 128-wide packed contraction:
    # slot j -> columns [j*(k+1), j*(k+1)+k) = x_row @ v, column j*(k+1)+k = x_row @ w.
    fused = jnp.dot(x, vw_ref[...], preferred_element_type=jnp.float32,
                    precision=_HIGHEST)                                # (TBp, f*(k+1))

    # -0.5 * sum_k (x^2 @ v^2), collapsed to a matvec per slot against rowsum(v^2).
    neg_half_ip2 = jnp.dot(x * x, s_ref[...],
                           preferred_element_type=jnp.float32,
                           precision=_HIGHEST)                         # (TBp, f)

    # 0.5 * sum_k ip1^2 per slot, on the (otherwise idle) MXU instead of a lane-sparse
    # VPU/XLU keepdims reduction.
    quad = jnp.dot(fused * fused, mq_ref[...],
                   preferred_element_type=jnp.float32,
                   precision=_HIGHEST)                                 # (TBp, f)

    # Linear part per slot (column selection as a tiny MXU pass; no strided lane gather).
    linear = jnp.dot(fused, ml_ref[...], preferred_element_type=jnp.float32,
                     precision=_HIGHEST)                               # (TBp, f)

    o_ref[...] = (linear + quad + neg_half_ip2 + bias).astype(o_ref.dtype)


def _round_up(n, m):
    return ((n + m - 1) // m) * m


def factorization_machine(x, v, w_t, b, *, tile_b=None):
    """x: (B, 2*in_dim); v: (2*in_dim, k); w_t: (2*in_dim, 1); b: (1, 1). Returns (B, 1) f32."""
    x = jnp.asarray(x, jnp.float32)
    B, D = x.shape
    k = v.shape[1]

    # ---- Lane packing -----------------------------------------------------------------
    # A (tile, D=32) f32 block would be only 25% lane-dense.  Pad D to a power of two that
    # divides 128 and pack f = 128 // Dp original rows into each 128-lane packed row, so the
    # streamed x tile is fully lane-dense and the MXU contraction is the full 128 lanes.
    if D <= 128:
        Dp = pl.next_power_of_2(D)
        f = 128 // Dp
    else:                                        # fallback: no packing, lane-dense anyway
        Dp = _round_up(D, 128)
        f = 1
    W = f * Dp                                   # packed lane width

    # ---- Batch tiling -----------------------------------------------------------------
    # VMEM budget (f32, double-buffered; blocks with last dim < 128 are lane-padded to 128):
    #   x   : 2 * (tile_b/f) * W * 4      (= 2 MiB at tile_b=8192, D=32 -- no lane padding)
    #   out : 2 * (tile_b/f) * 128 * 4    (f-wide block is lane-padded; 2 MiB at 8192 rows)
    # plus ~0.2 MiB of resident weights => ~4.3 MiB, under the 16 MiB v5e / 32 MiB v6e+v7x
    # default scoped limits.  The loop below keeps any configuration under 12 MiB.
    align = max(128, 8 * f)                      # keeps packed blocks (8,128)-aligned
    if tile_b is None:
        tile_b = 8192
    tile_b = _round_up(min(tile_b, _round_up(B, align)), align)

    def _vmem_bytes(tb):
        tbp_ = tb // f
        return 2 * tbp_ * W * 4 + 2 * tbp_ * 128 * 4 + (1 << 21)

    while tile_b > align and _vmem_bytes(tile_b) > (12 << 20):
        tile_b = _round_up(tile_b // 2, align)

    num_tiles = pl.cdiv(B, tile_b)
    b_pad = num_tiles * tile_b
    tbp = tile_b // f

    xp = jnp.zeros((b_pad, Dp), jnp.float32).at[:B, :D].set(x)
    xp = xp.reshape(b_pad // f, W)               # contiguous reshape -> lane-dense stream

    # ---- Loop-invariant parameter prep (once, wrapper-side) ----------------------------
    v32 = jnp.asarray(v, jnp.float32)
    w32 = jnp.asarray(w_t, jnp.float32)
    vw = jnp.zeros((Dp, k + 1), jnp.float32).at[:D].set(jnp.concatenate([v32, w32], axis=1))
    s = jnp.zeros((Dp, 1), jnp.float32).at[:D].set(jnp.sum(v32 * v32, axis=1, keepdims=True))
    eye_f = jnp.eye(f, dtype=jnp.float32)
    vw_big = jnp.kron(eye_f, vw)                                   # (W, f*(k+1)) block-diag
    s_big = jnp.kron(eye_f, -0.5 * s)                              # (W, f)
    sel_q = jnp.concatenate([jnp.full((k, 1), 0.5, jnp.float32),
                             jnp.zeros((1, 1), jnp.float32)], axis=0)
    sel_l = jnp.concatenate([jnp.zeros((k, 1), jnp.float32),
                             jnp.ones((1, 1), jnp.float32)], axis=0)
    mq = jnp.kron(eye_f, sel_q)                                    # (f*(k+1), f)
    ml = jnp.kron(eye_f, sel_l)                                    # (f*(k+1), f)
    bias = jnp.asarray(b, jnp.float32).reshape(1, 1)

    out_packed = pl.pallas_call(
        fm_kernel,
        out_shape=jax.ShapeDtypeStruct((b_pad // f, f), jnp.float32),
        grid=(num_tiles,),
        in_specs=[
            pl.BlockSpec(memory_space=pltpu.SMEM),                 # bias (1, 1)
            pl.BlockSpec((tbp, W), lambda i: (i, 0)),              # packed x (streamed)
            pl.BlockSpec((W, f * (k + 1)), lambda i: (0, 0)),      # block-diag [v|w] (resident)
            pl.BlockSpec((W, f), lambda i: (0, 0)),                # -0.5*rowsum(v^2) (resident)
            pl.BlockSpec((f * (k + 1), f), lambda i: (0, 0)),      # quad selector (resident)
            pl.BlockSpec((f * (k + 1), f), lambda i: (0, 0)),      # linear selector (resident)
        ],
        out_specs=pl.BlockSpec((tbp, f), lambda i: (i, 0)),
        compiler_params=pltpu.CompilerParams(
            dimension_semantics=("parallel",)),                    # megacore batch sharding
        cost_estimate=pl.CostEstimate(
            flops=2 * b_pad * Dp * (k + 2),
            transcendentals=0,
            bytes_accessed=(b_pad * Dp + b_pad + W * f * (k + 2)) * 4),
    )(bias, xp, vw_big, s_big, mq, ml)

    # Packed element [r, j] is original row r*f + j -> a contiguous flatten restores order.
    return out_packed.reshape(-1)[:B].reshape(B, 1)


def reference(x, v, w_t, b):
    """Pure-JAX mirror of the PyTorch FactorizationMachine.forward (full f32 matmuls)."""
    linear_part = jnp.dot(x, w_t, precision=_HIGHEST) + b[0, 0]       # (B, 1)
    ip1 = jnp.dot(x, v, precision=_HIGHEST)
    ip2 = jnp.dot(x * x, v * v, precision=_HIGHEST)
    pair = jnp.sum(ip1 * ip1 - ip2, axis=1, keepdims=True)
    return linear_part + 0.5 * pair


if __name__ == "__main__":
    # Shapes consistent with the module: in_dim = id_emb_size = 16 -> feature dim 32,
    # k = fm_hidden = 8, batch = 8.
    in_dim, k, B = 16, 8, 8
    D = 2 * in_dim

    key = jax.random.PRNGKey(0)
    kx, kv, kw, kb = jax.random.split(key, 4)

    # nn.Parameter v is zeros in __init__, which would trivialize the FM term;
    # use small random values instead to exercise the full compute path deterministically.
    x = jax.random.normal(kx, (B, D), dtype=jnp.float32)
    v = jax.random.normal(kv, (D, k), dtype=jnp.float32) * 0.1
    w_t = jax.random.normal(kw, (D, 1), dtype=jnp.float32) * 0.1       # Linear weight, transposed
    b = jax.random.normal(kb, (1, 1), dtype=jnp.float32)               # Linear bias

    out = factorization_machine(x, v, w_t, b)
    jax.block_until_ready(out)
    ref = reference(x, v, w_t, b)
    assert out.shape == (B, 1)
    # HIGHEST-precision matmuls on both sides; only reassociation (ip2 collapse / packing)
    # differs, so a tight tolerance holds.
    assert jnp.allclose(out, ref, atol=1e-4, rtol=1e-4), (out, ref)

    # Second check: multi-tile grid with a partial last tile (padding + packing + pipelining).
    B2 = 2500
    x2 = jax.random.normal(jax.random.PRNGKey(1), (B2, D), dtype=jnp.float32)
    out2 = factorization_machine(x2, v, w_t, b, tile_b=1024)
    jax.block_until_ready(out2)
    ref2 = reference(x2, v, w_t, b)
    assert out2.shape == (B2, 1)
    assert jnp.allclose(out2, ref2, atol=1e-4, rtol=1e-4), (out2, ref2)

    print("KERNEL_OK")
</pallas_src>

<mosaic_0001>
module attributes {stable_mosaic.version = 11 : i64} {
  func.func @fm_kernel(%arg0: i32, %arg1: memref<1x1xf32, #tpu.memory_space<smem>>, %arg2: memref<32x128xf32, #tpu.memory_space<vmem>>, %arg3: memref<128x36xf32, #tpu.memory_space<vmem>>, %arg4: memref<128x4xf32, #tpu.memory_space<vmem>>, %arg5: memref<36x4xf32, #tpu.memory_space<vmem>>, %arg6: memref<36x4xf32, #tpu.memory_space<vmem>>, %arg7: memref<32x4xf32, #tpu.memory_space<vmem>>) attributes {dimension_semantics = [#tpu.dimension_semantics<parallel>], iteration_bounds = array<i64: 1>, scalar_prefetch = 0 : i64, scratch_operands = 0 : i64, tpu.core_type = #tpu.core_type<tc>, window_params = [{transform_indices = @transform_0, window_bounds = array<i64: 1, 1>}, {transform_indices = @transform_1, window_bounds = array<i64: 32, 128>}, {pipeline_mode = #tpu.pipeline_mode<synchronous>, transform_indices = @transform_2, window_bounds = array<i64: 128, 36>}, {pipeline_mode = #tpu.pipeline_mode<synchronous>, transform_indices = @transform_3, window_bounds = array<i64: 128, 4>}, {pipeline_mode = #tpu.pipeline_mode<synchronous>, transform_indices = @transform_4, window_bounds = array<i64: 36, 4>}, {pipeline_mode = #tpu.pipeline_mode<synchronous>, transform_indices = @transform_5, window_bounds = array<i64: 36, 4>}, {transform_indices = @transform_6, window_bounds = array<i64: 32, 4>}]} {
    %c0 = arith.constant 0 : index
    %c0_0 = arith.constant 0 : index
    %0 = vector.load %arg2[%c0, %c0_0] : memref<32x128xf32, #tpu.memory_space<vmem>>, vector<32x128xf32>
    %c0_1 = arith.constant 0 : index
    %c0_2 = arith.constant 0 : index
    %1 = memref.load %arg1[%c0_1, %c0_2] : memref<1x1xf32, #tpu.memory_space<smem>>
    %c0_3 = arith.constant 0 : index
    %c0_4 = arith.constant 0 : index
    %2 = vector.load %arg3[%c0_3, %c0_4] : memref<128x36xf32, #tpu.memory_space<vmem>>, vector<128x36xf32>
    %cst = arith.constant dense<0.000000e+00> : vector<32x36xf32>
    %3 = tpu.matmul %0, %2, %cst {dimension_numbers = #tpu.dot_dimension_numbers<[1], [0], [0], [1], [0, 0, 1, 1], [], []>, precision = #tpu.contract_precision<fp32>} : vector<32x128xf32>, vector<128x36xf32>, vector<32x36xf32> -> vector<32x36xf32>
    %4 = arith.mulf %0, %0 : vector<32x128xf32>
    %c0_5 = arith.constant 0 : index
    %c0_6 = arith.constant 0 : index
    %5 = vector.load %arg4[%c0_5, %c0_6] : memref<128x4xf32, #tpu.memory_space<vmem>>, vector<128x4xf32>
    %cst_7 = arith.constant dense<0.000000e+00> : vector<32x4xf32>
    %6 = tpu.matmul %4, %5, %cst_7 {dimension_numbers = #tpu.dot_dimension_numbers<[1], [0], [0], [1], [0, 0, 1, 1], [], []>, precision = #tpu.contract_precision<fp32>} : vector<32x128xf32>, vector<128x4xf32>, vector<32x4xf32> -> vector<32x4xf32>
    %7 = arith.mulf %3, %3 : vector<32x36xf32>
    %c0_8 = arith.constant 0 : index
    %c0_9 = arith.constant 0 : index
    %8 = vector.load %arg5[%c0_8, %c0_9] : memref<36x4xf32, #tpu.memory_space<vmem>>, vector<36x4xf32>
    %cst_10 = arith.constant dense<0.000000e+00> : vector<32x4xf32>
    %9 = tpu.matmul %7, %8, %cst_10 {dimension_numbers = #tpu.dot_dimension_numbers<[1], [0], [0], [1], [0, 0, 1, 1], [], []>, precision = #tpu.contract_precision<fp32>} : vector<32x36xf32>, vector<36x4xf32>, vector<32x4xf32> -> vector<32x4xf32>
    %c0_11 = arith.constant 0 : index
    %c0_12 = arith.constant 0 : index
    %10 = vector.load %arg6[%c0_11, %c0_12] : memref<36x4xf32, #tpu.memory_space<vmem>>, vector<36x4xf32>
    %cst_13 = arith.constant dense<0.000000e+00> : vector<32x4xf32>
    %11 = tpu.matmul %3, %10, %cst_13 {dimension_numbers = #tpu.dot_dimension_numbers<[1], [0], [0], [1], [0, 0, 1, 1], [], []>, precision = #tpu.contract_precision<fp32>} : vector<32x36xf32>, vector<36x4xf32>, vector<32x4xf32> -> vector<32x4xf32>
    %12 = arith.addf %11, %9 : vector<32x4xf32>
    %13 = arith.addf %12, %6 : vector<32x4xf32>
    %14 = vector.broadcast %1 : f32 to vector<32x4xf32>
    %15 = arith.addf %13, %14 : vector<32x4xf32>
    %c0_14 = arith.constant 0 : index
    %c0_15 = arith.constant 0 : index
    %16 = vector.load %arg7[%c0_14, %c0_15] : memref<32x4xf32, #tpu.memory_space<vmem>>, vector<32x4xf32>
    tpu.vector_store %arg7[%c0_14, %c0_15], %15 {strides = array<i32>} : memref<32x4xf32, #tpu.memory_space<vmem>>, vector<32x4xf32>,
    return
  }
  func.func @transform_0(%arg0: i32) -> (i32, i32) {
    %c0_i32 = arith.constant 0 : i32
    %c0_i32_0 = arith.constant 0 : i32
    %c0_i32_1 = arith.constant 0 : i32
    return %c0_i32, %c0_i32_0 : i32, i32
  }
  func.func @transform_1(%arg0: i32) -> (i32, i32) {
    %c0_i32 = arith.constant 0 : i32
    %c0_i32_0 = arith.constant 0 : i32
    return %arg0, %c0_i32 : i32, i32
  }
  func.func @transform_2(%arg0: i32) -> (i32, i32) {
    %c0_i32 = arith.constant 0 : i32
    %c0_i32_0 = arith.constant 0 : i32
    %c0_i32_1 = arith.constant 0 : i32
    return %c0_i32, %c0_i32_0 : i32, i32
  }
  func.func @transform_3(%arg0: i32) -> (i32, i32) {
    %c0_i32 = arith.constant 0 : i32
    %c0_i32_0 = arith.constant 0 : i32
    %c0_i32_1 = arith.constant 0 : i32
    return %c0_i32, %c0_i32_0 : i32, i32
  }
  func.func @transform_4(%arg0: i32) -> (i32, i32) {
    %c0_i32 = arith.constant 0 : i32
    %c0_i32_0 = arith.constant 0 : i32
    %c0_i32_1 = arith.constant 0 : i32
    return %c0_i32, %c0_i32_0 : i32, i32
  }
  func.func @transform_5(%arg0: i32) -> (i32, i32) {
    %c0_i32 = arith.constant 0 : i32
    %c0_i32_0 = arith.constant 0 : i32
    %c0_i32_1 = arith.constant 0 : i32
    return %c0_i32, %c0_i32_0 : i32, i32
  }
  func.func @transform_6(%arg0: i32) -> (i32, i32) {
    %c0_i32 = arith.constant 0 : i32
    %c0_i32_0 = arith.constant 0 : i32
    return %arg0, %c0_i32 : i32, i32
  }
}

</mosaic_0001>

<llo_original>
// kernel: tpu_custom_call.1
$region0: #{tpu_custom_call.1}
  #allocation0 [shape = 'u32[]', space=smem, size = 0x4, offset = 0x4, fixed_abs, tag = 'smem constant byte address 0x4 - core index']
  #allocation1 [shape = 'u32[144,128]{1,0:T(1,128)}', space=vmem, size = 0x12000, scoped, tag = 'internal scratch']
  #allocation2 [shape = 'f32[1,1]{1,0:T(1,128)S(6)}', space=smem, size = 0x200, scoped, tag = 'scoped memory for tpu_custom_call.1']
  %s0 = inlined_call_operand.<no memory space> [shape: f32[1,1], index: 0, kind: input, shape index: {}]
  %s1 = inlined_call_operand.vmem [shape: f32[32,128], index: 1, kind: input, shape index: {}]
  %s2 = inlined_call_operand.vmem [shape: f32[128,36], index: 2, kind: input, shape index: {}]
  %s3 = inlined_call_operand.vmem [shape: f32[128,4], index: 3, kind: input, shape index: {}]
  %s4 = inlined_call_operand.vmem [shape: f32[36,4], index: 4, kind: input, shape index: {}]
  %s5 = inlined_call_operand.vmem [shape: f32[36,4], index: 5, kind: input, shape index: {}]
  %s6 = inlined_call_operand.vmem [shape: f32[32,4], index: 6, kind: output, shape index: {}]
  %s7 = sld [smem:[#allocation0]]
  $region34: #{tpu_custom_call.1} parent=0
    _
  %s9 = ssub.s32 1, %s7
  %s10 = scalar_select 0, %s9, %s7
  %11 = sst [smem:[#allocation2]] %s0
  // Predicated region
  $region2: #{tpu_custom_call.1} parent=0 // pred_check
    _
  $region3: #{tpu_custom_call.1} parent=0 // pred_check_branch
    %13 = sbr.rel (0) target = $region5
  $region4: #{tpu_custom_call.1} parent=0 // pred_region
    _
  $region5: #{tpu_custom_call.1} parent=0 // pred_fallthru
    _
  // Predicated region
  $region6: #{tpu_custom_call.1} parent=0 // pred_check
    _
  $region7: #{tpu_custom_call.1} parent=0 // pred_check_branch
    %15 = sbr.rel (0) target = $region9
  $region8: #{tpu_custom_call.1} parent=0 // pred_region
    _
  $region9: #{tpu_custom_call.1} parent=0 // pred_fallthru
    _
  // Predicated region
  $region10: #{tpu_custom_call.1} parent=0 // pred_check
    _
  $region11: #{tpu_custom_call.1} parent=0 // pred_check_branch
    %17 = sbr.rel (0) target = $region13
  $region12: #{tpu_custom_call.1} parent=0 // pred_region
    _
  $region13: #{tpu_custom_call.1} parent=0 // pred_fallthru
    _
  // Predicated region
  $region14: #{tpu_custom_call.1} parent=0 // pred_check
    _
  $region15: #{tpu_custom_call.1} parent=0 // pred_check_branch
    %19 = sbr.rel (0) target = $region17
  $region16: #{tpu_custom_call.1} parent=0 // pred_region
    _
  $region17: #{tpu_custom_call.1} parent=0 // pred_fallthru
    _
  // Predicated region
  $region18: #{tpu_custom_call.1} parent=0 // pred_check
    _
  $region19: #{tpu_custom_call.1} parent=0 // pred_check_branch
    %21 = sbr.rel (0) target = $region21
  $region20: #{tpu_custom_call.1} parent=0 // pred_region
    _
  $region21: #{tpu_custom_call.1} parent=0 // pred_fallthru
    _
  // Predicated region
  $region22: #{tpu_custom_call.1} parent=0 // pred_check
    _
  $region23: #{tpu_custom_call.1} parent=0 // pred_check_branch
    %23 = sbr.rel (0) target = $region25
  $region24: #{tpu_custom_call.1} parent=0 // pred_region
    _
  $region25: #{tpu_custom_call.1} parent=0 // pred_fallthru
    _
  %v24 = vld [vmem:[%s1] sm:$0xff]
  %v25 = vld [vmem:[%s1 + $0x8] sm:$0xff]
  %v26 = vld [vmem:[%s1 + $0x10] sm:$0xff]
  %v27 = vld [vmem:[%s1 + $0x18] sm:$0xff]
  %s28 = sld [smem:[#allocation2]]
  %v29 = vld [vmem:[%s2] sm:$0xff]
  %v30 = vld [vmem:[%s2 + $0x8] sm:$0xff]
  %v31 = vld [vmem:[%s2 + $0x10] sm:$0xff]
  %v32 = vld [vmem:[%s2 + $0x18] sm:$0xff]
  %v33 = vld [vmem:[%s2 + $0x20] sm:$0xff]
  %v34 = vld [vmem:[%s2 + $0x28] sm:$0xff]
  %v35 = vld [vmem:[%s2 + $0x30] sm:$0xff]
  %v36 = vld [vmem:[%s2 + $0x38] sm:$0xff]
  %v37 = vld [vmem:[%s2 + $0x40] sm:$0xff]
  %v38 = vld [vmem:[%s2 + $0x48] sm:$0xff]
  %v39 = vld [vmem:[%s2 + $0x50] sm:$0xff]
  %v40 = vld [vmem:[%s2 + $0x58] sm:$0xff]
  %v41 = vld [vmem:[%s2 + $0x60] sm:$0xff]
  %v42 = vld [vmem:[%s2 + $0x68] sm:$0xff]
  %v43 = vld [vmem:[%s2 + $0x70] sm:$0xff]
  %v44 = vld [vmem:[%s2 + $0x78] sm:$0xff]
  %45 = vmatprep.subr.mxu0 0.0
  %v46 = vand.u32 %v44, 4294901760
  %47 = vmatpush1.msra.mxu0 %v46
  %48 = vmatprep.subr.mxu0 0.0
  %v49 = vand.u32 %v43, 4294901760
  %50 = vmatpush1.msra.mxu0 %v49
  %51 = vmatprep.subr.mxu0 0.0
  %v52 = vand.u32 %v42, 4294901760
  %53 = vmatpush1.msra.mxu0 %v52
  %54 = vmatprep.subr.mxu0 0.0
  %v55 = vand.u32 %v41, 4294901760
  %56 = vmatpush1.msra.mxu0 %v55
  %57 = vmatprep.subr.mxu0 0.0
  %v58 = vand.u32 %v40, 4294901760
  %59 = vmatpush1.msra.mxu0 %v58
  %60 = vmatprep.subr.mxu0 0.0
  %v61 = vand.u32 %v39, 4294901760
  %62 = vmatpush1.msra.mxu0 %v61
  %63 = vmatprep.subr.mxu0 0.0
  %v64 = vand.u32 %v38, 4294901760
  %65 = vmatpush1.msra.mxu0 %v64
  %66 = vmatprep.subr.mxu0 0.0
  %v67 = vand.u32 %v37, 4294901760
  %68 = vmatpush1.msra.mxu0 %v67
  %69 = vmatprep.subr.mxu0 0.0
  %v70 = vand.u32 %v36, 4294901760
  %71 = vmatpush1.msra.mxu0 %v70
  %72 = vmatprep.subr.mxu0 0.0
  %v73 = vand.u32 %v35, 4294901760
  %74 = vmatpush1.msra.mxu0 %v73
  %75 = vmatprep.subr.mxu0 0.0
  %v76 = vand.u32 %v34, 4294901760
  %77 = vmatpush1.msra.mxu0 %v76
  %78 = vmatprep.subr.mxu0 0.0
  %v79 = vand.u32 %v33, 4294901760
  %80 = vmatpush1.msra.mxu0 %v79
  %81 = vmatprep.subr.mxu0 0.0
  %v82 = vand.u32 %v32, 4294901760
  %83 = vmatpush1.msra.mxu0 %v82
  %84 = vmatprep.subr.mxu0 0.0
  %v85 = vand.u32 %v31, 4294901760
  %86 = vmatpush1.msra.mxu0 %v85
  %87 = vmatprep.subr.mxu0 0.0
  %v88 = vand.u32 %v30, 4294901760
  %89 = vmatpush1.msra.mxu0 %v88
  %90 = vmatprep.subr.mxu0 0.0
  %v91 = vand.u32 %v29, 4294901760
  %92 = vmatpush1.msra.mxu0 %v91
  %93 = vmatprep.subr.mxu0 0.0
  %94 = vmatpush2.msra.mxu0 0.0
  %95 = vmatprep.subr.mxu0 0.0
  %96 = vmatpush2.msra.mxu0 0.0
  %97 = vmatprep.subr.mxu0 0.0
  %98 = vmatpush2.msra.mxu0 0.0
  %99 = vmatprep.subr.mxu0 0.0
  %100 = vmatpush2.msra.mxu0 0.0
  %101 = vmatprep.subr.mxu0 0.0
  %102 = vmatpush2.msra.mxu0 0.0
  %103 = vmatprep.subr.mxu0 0.0
  %104 = vmatpush2.msra.mxu0 0.0
  %105 = vmatprep.subr.mxu0 0.0
  %106 = vmatpush2.msra.mxu0 0.0
  %107 = vmatprep.subr.mxu0 0.0
  %108 = vmatpush2.msra.mxu0 0.0
  %109 = vmatprep.subr.mxu0 0.0
  %110 = vmatpush2.msra.mxu0 0.0
  %111 = vmatprep.subr.mxu0 0.0
  %112 = vmatpush2.msra.mxu0 0.0
  %113 = vmatprep.subr.mxu0 0.0
  %114 = vmatpush2.msra.mxu0 0.0
  %115 = vmatprep.subr.mxu0 0.0
  %116 = vmatpush2.msra.mxu0 0.0
  %117 = vmatprep.subr.mxu0 0.0
  %118 = vmatpush2.msra.mxu0 0.0
  %119 = vmatprep.subr.mxu0 0.0
  %120 = vmatpush2.msra.mxu0 0.0
  %121 = vmatprep.subr.mxu0 0.0
  %122 = vmatpush2.msra.mxu0 0.0
  %123 = vmatprep.subr.mxu0 0.0
  %124 = vmatpush2.msra.mxu0 0.0
  %125 = vmatprep.mubr.f32.mxu0 0.0
  %v126 = vand.u32 %v24, 4294901760
  %v127 = vsub.f32 %v24, %v126
  %v128 = vand.u32 %v127, 4294901760
  %v129 = vsub.f32 %v127, %v128
  %v130 = vand.u32 %v129, 4294901760
  %131 = vmatmul.mubr.f32.gmra.mxu0 %v130
  %v132 = vpop.f32.mrf.mxu0
  %v133 = vadd.f32 0.0, %v132
  %v134 = vpop.f32.mrf.mxu0
  %135 = vmatprep.mubr.f32.mxu0 0.0
  %v136 = vand.u32 %v25, 4294901760
  %v137 = vsub.f32 %v25, %v136
  %v138 = vand.u32 %v137, 4294901760
  %v139 = vsub.f32 %v137, %v138
  %v140 = vand.u32 %v139, 4294901760
  %141 = vmatmul.mubr.f32.gmra.mxu0 %v140
  %v142 = vpop.f32.mrf.mxu0
  %v143 = vadd.f32 0.0, %v142
  %v144 = vpop.f32.mrf.mxu0
  %145 = vmatprep.mubr.f32.mxu0 0.0
  %v146 = vand.u32 %v26, 4294901760
  %v147 = vsub.f32 %v26, %v146
  %v148 = vand.u32 %v147, 4294901760
  %v149 = vsub.f32 %v147, %v148
  %v150 = vand.u32 %v149, 4294901760
  %151 = vmatmul.mubr.f32.gmra.mxu0 %v150
  %v152 = vpop.f32.mrf.mxu0
  %v153 = vadd.f32 0.0, %v152
  %v154 = vpop.f32.mrf.mxu0
  %155 = vmatprep.mubr.f32.mxu0 0.0
  %v156 = vand.u32 %v27, 4294901760
  %v157 = vsub.f32 %v27, %v156
  %v158 = vand.u32 %v157, 4294901760
  %v159 = vsub.f32 %v157, %v158
  %v160 = vand.u32 %v159, 4294901760
  %161 = vmatmul.mubr.f32.gmra.mxu0 %v160
  %v162 = vpop.f32.mrf.mxu0
  %v163 = vadd.f32 0.0, %v162
  %v164 = vpop.f32.mrf.mxu0
  %165 = vdwg.mxu0
  %166 = vmatprep.subr.mxu0 0.0
  %v167 = vand.u32 %v44, 4294901760
  %v168 = vsub.f32 %v44, %v167
  %v169 = vand.u32 %v168, 4294901760
  %v170 = vsub.f32 %v168, %v169
  %v171 = vand.u32 %v170, 4294901760
  %172 = vmatpush1.msra.mxu0 %v171
  %173 = vmatprep.subr.mxu0 0.0
  %v174 = vand.u32 %v43, 4294901760
  %v175 = vsub.f32 %v43, %v174
  %v176 = vand.u32 %v175, 4294901760
  %v177 = vsub.f32 %v175, %v176
  %v178 = vand.u32 %v177, 4294901760
  %179 = vmatpush1.msra.mxu0 %v178
  %180 = vmatprep.subr.mxu0 0.0
  %v181 = vand.u32 %v42, 4294901760
  %v182 = vsub.f32 %v42, %v181
  %v183 = vand.u32 %v182, 4294901760
  %v184 = vsub.f32 %v182, %v183
  %v185 = vand.u32 %v184, 4294901760
  %186 = vmatpush1.msra.mxu0 %v185
  %187 = vmatprep.subr.mxu0 0.0
  %v188 = vand.u32 %v41, 4294901760
  %v189 = vsub.f32 %v41, %v188
  %v190 = vand.u32 %v189, 4294901760
  %v191 = vsub.f32 %v189, %v190
  %v192 = vand.u32 %v191, 4294901760
  %193 = vmatpush1.msra.mxu0 %v192
  %194 = vmatprep.subr.mxu0 0.0
  %v195 = vand.u32 %v40, 4294901760
  %v196 = vsub.f32 %v40, %v195
  %v197 = vand.u32 %v196, 4294901760
  %v198 = vsub.f32 %v196, %v197
  %v199 = vand.u32 %v198, 4294901760
  %200 = vmatpush1.msra.mxu0 %v199
  %201 = vmatprep.subr.mxu0 0.0
  %v202 = vand.u32 %v39, 4294901760
  %v203 = vsub.f32 %v39, %v202
  %v204 = vand.u32 %v203, 4294901760
  %v205 = vsub.f32 %v203, %v204
  %v206 = vand.u32 %v205, 4294901760
  %207 = vmatpush1.msra.mxu0 %v206
  %208 = vmatprep.subr.mxu0 0.0
  %v209 = vand.u32 %v38, 4294901760
  %v210 = vsub.f32 %v38, %v209
  %v211 = vand.u32 %v210, 4294901760
  %v212 = vsub.f32 %v210, %v211
  %v213 = vand.u32 %v212, 4294901760
  %214 = vmatpush1.msra.mxu0 %v213
  %215 = vmatprep.subr.mxu0 0.0
  %v216 = vand.u32 %v37, 4294901760
  %v217 = vsub.f32 %v37, %v216
  %v218 = vand.u32 %v217, 4294901760
  %v219 = vsub.f32 %v217, %v218
  %v220 = vand.u32 %v219, 4294901760
  %221 = vmatpush1.msra.mxu0 %v220
  %222 = vmatprep.subr.mxu0 0.0
  %v223 = vand.u32 %v36, 4294901760
  %v224 = vsub.f32 %v36, %v223
  %v225 = vand.u32 %v224, 4294901760
  %v226 = vsub.f32 %v224, %v225
  %v227 = vand.u32 %v226, 4294901760
  %228 = vmatpush1.msra.mxu0 %v227
  %229 = vmatprep.subr.mxu0 0.0
  %v230 = vand.u32 %v35, 4294901760
  %v231 = vsub.f32 %v35, %v230
  %v232 = vand.u32 %v231, 4294901760
  %v233 = vsub.f32 %v231, %v232
  %v234 = vand.u32 %v233, 4294901760
  %235 = vmatpush1.msra.mxu0 %v234
  %236 = vmatprep.subr.mxu0 0.0
  %v237 = vand.u32 %v34, 4294901760
  %v238 = vsub.f32 %v34, %v237
  %v239 = vand.u32 %v238, 4294901760
  %v240 = vsub.f32 %v238, %v239
  %v241 = vand.u32 %v240, 4294901760
  %242 = vmatpush1.msra.mxu0 %v241
  %243 = vmatprep.subr.mxu0 0.0
  %v244 = vand.u32 %v33, 4294901760
  %v245 = vsub.f32 %v33, %v244
  %v246 = vand.u32 %v245, 4294901760
  %v247 = vsub.f32 %v245, %v246
  %v248 = vand.u32 %v247, 4294901760
  %249 = vmatpush1.msra.mxu0 %v248
  %250 = vmatprep.subr.mxu0 0.0
  %v251 = vand.u32 %v32, 4294901760
  %v252 = vsub.f32 %v32, %v251
  %v253 = vand.u32 %v252, 4294901760
  %v254 = vsub.f32 %v252, %v253
  %v255 = vand.u32 %v254, 4294901760
  %256 = vmatpush1.msra.mxu0 %v255
  %257 = vmatprep.subr.mxu0 0.0
  %v258 = vand.u32 %v31, 4294901760
  %v259 = vsub.f32 %v31, %v258
  %v260 = vand.u32 %v259, 4294901760
  %v261 = vsub.f32 %v259, %v260
  %v262 = vand.u32 %v261, 4294901760
  %263 = vmatpush1.msra.mxu0 %v262
  %264 = vmatprep.subr.mxu0 0.0
  %v265 = vand.u32 %v30, 4294901760
  %v266 = vsub.f32 %v30, %v265
  %v267 = vand.u32 %v266, 4294901760
  %v268 = vsub.f32 %v266, %v267
  %v269 = vand.u32 %v268, 4294901760
  %270 = vmatpush1.msra.mxu0 %v269
  %271 = vmatprep.subr.mxu0 0.0
  %v272 = vand.u32 %v29, 4294901760
  %v273 = vsub.f32 %v29, %v272
  %v274 = vand.u32 %v273, 4294901760
  %v275 = vsub.f32 %v273, %v274
  %v276 = vand.u32 %v275, 4294901760
  %277 = vmatpush1.msra.mxu0 %v276
  %278 = vmatprep.subr.mxu0 0.0
  %279 = vmatpush2.msra.mxu0 0.0
  %280 = vmatprep.subr.mxu0 0.0
  %281 = vmatpush2.msra.mxu0 0.0
  %282 = vmatprep.subr.mxu0 0.0
  %283 = vmatpush2.msra.mxu0 0.0
  %284 = vmatprep.subr.mxu0 0.0
  %285 = vmatpush2.msra.mxu0 0.0
  %286 = vmatprep.subr.mxu0 0.0
  %287 = vmatpush2.msra.mxu0 0.0
  %288 = vmatprep.subr.mxu0 0.0
  %289 = vmatpush2.msra.mxu0 0.0
  %290 = vmatprep.subr.mxu0 0.0
  %291 = vmatpush2.msra.mxu0 0.0
  %292 = vmatprep.subr.mxu0 0.0
  %293 = vmatpush2.msra.mxu0 0.0
  %294 = vmatprep.subr.mxu0 0.0
  %295 = vmatpush2.msra.mxu0 0.0
  %296 = vmatprep.subr.mxu0 0.0
  %297 = vmatpush2.msra.mxu0 0.0
  %298 = vmatprep.subr.mxu0 0.0
  %299 = vmatpush2.msra.mxu0 0.0
  %300 = vmatprep.subr.mxu0 0.0
  %301 = vmatpush2.msra.mxu0 0.0
  %302 = vmatprep.subr.mxu0 0.0
  %303 = vmatpush2.msra.mxu0 0.0
  %304 = vmatprep.subr.mxu0 0.0
  %305 = vmatpush2.msra.mxu0 0.0
  %306 = vmatprep.subr.mxu0 0.0
  %307 = vmatpush2.msra.mxu0 0.0
  %308 = vmatprep.subr.mxu0 0.0
  %309 = vmatpush2.msra.mxu0 0.0
  %310 = vmatprep.mubr.f32.mxu0 0.0
  %v311 = vand.u32 %v24, 4294901760
  %312 = vmatmul.mubr.f32.gmra.mxu0 %v311
  %v313 = vpop.f32.mrf.mxu0
  %v314 = vadd.f32 %v133, %v313
  %v315 = vpop.f32.mrf.mxu0
  %316 = vmatprep.mubr.f32.mxu0 0.0
  %v317 = vand.u32 %v25, 4294901760
  %318 = vmatmul.mubr.f32.gmra.mxu0 %v317
  %v319 = vpop.f32.mrf.mxu0
  %v320 = vadd.f32 %v143, %v319
  %v321 = vpop.f32.mrf.mxu0
  %322 = vmatprep.mubr.f32.mxu0 0.0
  %v323 = vand.u32 %v26, 4294901760
  %324 = vmatmul.mubr.f32.gmra.mxu0 %v323
  %v325 = vpop.f32.mrf.mxu0
  %v326 = vadd.f32 %v153, %v325
  %v327 = vpop.f32.mrf.mxu0
  %328 = vmatprep.mubr.f32.mxu0 0.0
  %v329 = vand.u32 %v27, 4294901760
  %330 = vmatmul.mubr.f32.gmra.mxu0 %v329
  %v331 = vpop.f32.mrf.mxu0
  %v332 = vadd.f32 %v163, %v331
  %v333 = vpop.f32.mrf.mxu0
  %334 = vdwg.mxu0
  %335 = vmatprep.subr.mxu0 0.0
  %v336 = vand.u32 %v44, 4294901760
  %v337 = vsub.f32 %v44, %v336
  %338 = vmatpush1.msra.mxu0 %v337
  %339 = vmatprep.subr.mxu0 0.0
  %v340 = vand.u32 %v43, 4294901760
  %v341 = vsub.f32 %v43, %v340
  %342 = vmatpush1.msra.mxu0 %v341
  %343 = vmatprep.subr.mxu0 0.0
  %v344 = vand.u32 %v42, 4294901760
  %v345 = vsub.f32 %v42, %v344
  %346 = vmatpush1.msra.mxu0 %v345
  %347 = vmatprep.subr.mxu0 0.0
  %v348 = vand.u32 %v41, 4294901760
  %v349 = vsub.f32 %v41, %v348
  %350 = vmatpush1.msra.mxu0 %v349
  %351 = vmatprep.subr.mxu0 0.0
  %v352 = vand.u32 %v40, 4294901760
  %v353 = vsub.f32 %v40, %v352
  %354 = vmatpush1.msra.mxu0 %v353
  %355 = vmatprep.subr.mxu0 0.0
  %v356 = vand.u32 %v39, 4294901760
  %v357 = vsub.f32 %v39, %v356
  %358 = vmatpush1.msra.mxu0 %v357
  %359 = vmatprep.subr.mxu0 0.0
  %v360 = vand.u32 %v38, 4294901760
  %v361 = vsub.f32 %v38, %v360
  %362 = vmatpush1.msra.mxu0 %v361
  %363 = vmatprep.subr.mxu0 0.0
  %v364 = vand.u32 %v37, 4294901760
  %v365 = vsub.f32 %v37, %v364
  %366 = vmatpush1.msra.mxu0 %v365
  %367 = vmatprep.subr.mxu0 0.0
  %v368 = vand.u32 %v36, 4294901760
  %v369 = vsub.f32 %v36, %v368
  %370 = vmatpush1.msra.mxu0 %v369
  %371 = vmatprep.subr.mxu0 0.0
  %v372 = vand.u32 %v35, 4294901760
  %v373 = vsub.f32 %v35, %v372
  %374 = vmatpush1.msra.mxu0 %v373
  %375 = vmatprep.subr.mxu0 0.0
  %v376 = vand.u32 %v34, 4294901760
  %v377 = vsub.f32 %v34, %v376
  %378 = vmatpush1.msra.mxu0 %v377
  %379 = vmatprep.subr.mxu0 0.0
  %v380 = vand.u32 %v33, 4294901760
  %v381 = vsub.f32 %v33, %v380
  %382 = vmatpush1.msra.mxu0 %v381
  %383 = vmatprep.subr.mxu0 0.0
  %v384 = vand.u32 %v32, 4294901760
  %v385 = vsub.f32 %v32, %v384
  %386 = vmatpush1.msra.mxu0 %v385
  %387 = vmatprep.subr.mxu0 0.0
  %v388 = vand.u32 %v31, 4294901760
  %v389 = vsub.f32 %v31, %v388
  %390 = vmatpush1.msra.mxu0 %v389
  %391 = vmatprep.subr.mxu0 0.0
  %v392 = vand.u32 %v30, 4294901760
  %v393 = vsub.f32 %v30, %v392
  %394 = vmatpush1.msra.mxu0 %v393
  %395 = vmatprep.subr.mxu0 0.0
  %v396 = vand.u32 %v29, 4294901760
  %v397 = vsub.f32 %v29, %v396
  %398 = vmatpush1.msra.mxu0 %v397
  %399 = vmatprep.subr.mxu0 0.0
  %400 = vmatpush2.msra.mxu0 0.0
  %401 = vmatprep.subr.mxu0 0.0
  %402 = vmatpush2.msra.mxu0 0.0
  %403 = vmatprep.subr.mxu0 0.0
  %404 = vmatpush2.msra.mxu0 0.0
  %405 = vmatprep.subr.mxu0 0.0
  %406 = vmatpush2.msra.mxu0 0.0
  %407 = vmatprep.subr.mxu0 0.0
  %408 = vmatpush2.msra.mxu0 0.0
  %409 = vmatprep.subr.mxu0 0.0
  %410 = vmatpush2.msra.mxu0 0.0
  %411 = vmatprep.subr.mxu0 0.0
  %412 = vmatpush2.msra.mxu0 0.0
  %413 = vmatprep.subr.mxu0 0.0
  %414 = vmatpush2.msra.mxu0 0.0
  %415 = vmatprep.subr.mxu0 0.0
  %416 = vmatpush2.msra.mxu0 0.0
  %417 = vmatprep.subr.mxu0 0.0
  %418 = vmatpush2.msra.mxu0 0.0
  %419 = vmatprep.subr.mxu0 0.0
  %420 = vmatpush2.msra.mxu0 0.0
  %421 = vmatprep.subr.mxu0 0.0
  %422 = vmatpush2.msra.mxu0 0.0
  %423 = vmatprep.subr.mxu0 0.0
  %424 = vmatpush2.msra.mxu0 0.0
  %425 = vmatprep.subr.mxu0 0.0
  %426 = vmatpush2.msra.mxu0 0.0
  %427 = vmatprep.subr.mxu0 0.0
  %428 = vmatpush2.msra.mxu0 0.0
  %429 = vmatprep.subr.mxu0 0.0
  %430 = vmatpush2.msra.mxu0 0.0
  %431 = vmatprep.mubr.f32.mxu0 0.0
  %v432 = vand.u32 %v24, 4294901760
  %v433 = vsub.f32 %v24, %v432
  %434 = vmatmul.mubr.f32.gmra.mxu0 %v433
  %v435 = vpop.f32.mrf.mxu0
  %v436 = vadd.f32 %v314, %v435
  %v437 = vpop.f32.mrf.mxu0
  %438 = vmatprep.mubr.f32.mxu0 0.0
  %v439 = vand.u32 %v25, 4294901760
  %v440 = vsub.f32 %v25, %v439
  %441 = vmatmul.mubr.f32.gmra.mxu0 %v440
  %v442 = vpop.f32.mrf.mxu0
  %v443 = vadd.f32 %v320, %v442
  %v444 = vpop.f32.mrf.mxu0
  %445 = vmatprep.mubr.f32.mxu0 0.0
  %v446 = vand.u32 %v26, 4294901760
  %v447 = vsub.f32 %v26, %v446
  %448 = vmatmul.mubr.f32.gmra.mxu0 %v447
  %v449 = vpop.f32.mrf.mxu0
  %v450 = vadd.f32 %v326, %v449
  %v451 = vpop.f32.mrf.mxu0
  %452 = vmatprep.mubr.f32.mxu0 0.0
  %v453 = vand.u32 %v27, 4294901760
  %v454 = vsub.f32 %v27, %v453
  %455 = vmatmul.mubr.f32.gmra.mxu0 %v454
  %v456 = vpop.f32.mrf.mxu0
  %v457 = vadd.f32 %v332, %v456
  %v458 = vpop.f32.mrf.mxu0
  %459 = vdwg.mxu0
  %460 = vmatprep.subr.mxu0 0.0
  %v461 = vand.u32 %v44, 4294901760
  %462 = vmatpush1.msra.mxu0 %v461
  %463 = vmatprep.subr.mxu0 0.0
  %v464 = vand.u32 %v43, 4294901760
  %465 = vmatpush1.msra.mxu0 %v464
  %466 = vmatprep.subr.mxu0 0.0
  %v467 = vand.u32 %v42, 4294901760
  %468 = vmatpush1.msra.mxu0 %v467
  %469 = vmatprep.subr.mxu0 0.0
  %v470 = vand.u32 %v41, 4294901760
  %471 = vmatpush1.msra.mxu0 %v470
  %472 = vmatprep.subr.mxu0 0.0
  %v473 = vand.u32 %v40, 4294901760
  %474 = vmatpush1.msra.mxu0 %v473
  %475 = vmatprep.subr.mxu0 0.0
  %v476 = vand.u32 %v39, 4294901760
  %477 = vmatpush1.msra.mxu0 %v476
  %478 = vmatprep.subr.mxu0 0.0
  %v479 = vand.u32 %v38, 4294901760
  %480 = vmatpush1.msra.mxu0 %v479
  %481 = vmatprep.subr.mxu0 0.0
  %v482 = vand.u32 %v37, 4294901760
  %483 = vmatpush1.msra.mxu0 %v482
  %484 = vmatprep.subr.mxu0 0.0
  %v485 = vand.u32 %v36, 4294901760
  %486 = vmatpush1.msra.mxu0 %v485
  %487 = vmatprep.subr.mxu0 0.0
  %v488 = vand.u32 %v35, 4294901760
  %489 = vmatpush1.msra.mxu0 %v488
  %490 = vmatprep.subr.mxu0 0.0
  %v491 = vand.u32 %v34, 4294901760
  %492 = vmatpush1.msra.mxu0 %v491
  %493 = vmatprep.subr.mxu0 0.0
  %v494 = vand.u32 %v33, 4294901760
  %495 = vmatpush1.msra.mxu0 %v494
  %496 = vmatprep.subr.mxu0 0.0
  %v497 = vand.u32 %v32, 4294901760
  %498 = vmatpush1.msra.mxu0 %v497
  %499 = vmatprep.subr.mxu0 0.0
  %v500 = vand.u32 %v31, 4294901760
  %501 = vmatpush1.msra.mxu0 %v500
  %502 = vmatprep.subr.mxu0 0.0
  %v503 = vand.u32 %v30, 4294901760
  %504 = vmatpush1.msra.mxu0 %v503
  %505 = vmatprep.subr.mxu0 0.0
  %v506 = vand.u32 %v29, 4294901760
  %507 = vmatpush1.msra.mxu0 %v506
  %508 = vmatprep.subr.mxu0 0.0
  %509 = vmatpush2.msra.mxu0 0.0
  %510 = vmatprep.subr.mxu0 0.0
  %511 = vmatpush2.msra.mxu0 0.0
  %512 = vmatprep.subr.mxu0 0.0
  %513 = vmatpush2.msra.mxu0 0.0
  %514 = vmatprep.subr.mxu0 0.0
  %515 = vmatpush2.msra.mxu0 0.0
  %516 = vmatprep.subr.mxu0 0.0
  %517 = vmatpush2.msra.mxu0 0.0
  %518 = vmatprep.subr.mxu0 0.0
  %519 = vmatpush2.msra.mxu0 0.0
  %520 = vmatprep.subr.mxu0 0.0
  %521 = vmatpush2.msra.mxu0 0.0
  %522 = vmatprep.subr.mxu0 0.0
  %523 = vmatpush2.msra.mxu0 0.0
  %524 = vmatprep.subr.mxu0 0.0
  %525 = vmatpush2.msra.mxu0 0.0
  %526 = vmatprep.subr.mxu0 0.0
  %527 = vmatpush2.msra.mxu0 0.0
  %528 = vmatprep.subr.mxu0 0.0
  %529 = vmatpush2.msra.mxu0 0.0
  %530 = vmatprep.subr.mxu0 0.0
  %531 = vmatpush2.msra.mxu0 0.0
  %532 = vmatprep.subr.mxu0 0.0
  %533 = vmatpush2.msra.mxu0 0.0
  %534 = vmatprep.subr.mxu0 0.0
  %535 = vmatpush2.msra.mxu0 0.0
  %536 = vmatprep.subr.mxu0 0.0
  %537 = vmatpush2.msra.mxu0 0.0
  %538 = vmatprep.subr.mxu0 0.0
  %539 = vmatpush2.msra.mxu0 0.0
  %540 = vmatprep.mubr.f32.mxu0 0.0
  %v541 = vand.u32 %v24, 4294901760
  %v542 = vsub.f32 %v24, %v541
  %v543 = vand.u32 %v542, 4294901760
  %544 = vmatmul.mubr.f32.gmra.mxu0 %v543
  %v545 = vpop.f32.mrf.mxu0
  %v546 = vadd.f32 %v436, %v545
  %v547 = vpop.f32.mrf.mxu0
  %548 = vmatprep.mubr.f32.mxu0 0.0
  %v549 = vand.u32 %v25, 4294901760
  %v550 = vsub.f32 %v25, %v549
  %v551 = vand.u32 %v550, 4294901760
  %552 = vmatmul.mubr.f32.gmra.mxu0 %v551
  %v553 = vpop.f32.mrf.mxu0
  %v554 = vadd.f32 %v443, %v553
  %v555 = vpop.f32.mrf.mxu0
  %556 = vmatprep.mubr.f32.mxu0 0.0
  %v557 = vand.u32 %v26, 4294901760
  %v558 = vsub.f32 %v26, %v557
  %v559 = vand.u32 %v558, 4294901760
  %560 = vmatmul.mubr.f32.gmra.mxu0 %v559
  %v561 = vpop.f32.mrf.mxu0
  %v562 = vadd.f32 %v450, %v561
  %v563 = vpop.f32.mrf.mxu0
  %564 = vmatprep.mubr.f32.mxu0 0.0
  %v565 = vand.u32 %v27, 4294901760
  %v566 = vsub.f32 %v27, %v565
  %v567 = vand.u32 %v566, 4294901760
  %568 = vmatmul.mubr.f32.gmra.mxu0 %v567
  %v569 = vpop.f32.mrf.mxu0
  %v570 = vadd.f32 %v457, %v569
  %v571 = vpop.f32.mrf.mxu0
  %572 = vdwg.mxu0
  %573 = vmatprep.subr.mxu0 0.0
  %v574 = vand.u32 %v44, 4294901760
  %v575 = vsub.f32 %v44, %v574
  %v576 = vand.u32 %v575, 4294901760
  %577 = vmatpush1.msra.mxu0 %v576
  %578 = vmatprep.subr.mxu0 0.0
  %v579 = vand.u32 %v43, 4294901760
  %v580 = vsub.f32 %v43, %v579
  %v581 = vand.u32 %v580, 4294901760
  %582 = vmatpush1.msra.mxu0 %v581
  %583 = vmatprep.subr.mxu0 0.0
  %v584 = vand.u32 %v42, 4294901760
  %v585 = vsub.f32 %v42, %v584
  %v586 = vand.u32 %v585, 4294901760
  %587 = vmatpush1.msra.mxu0 %v586
  %588 = vmatprep.subr.mxu0 0.0
  %v589 = vand.u32 %v41, 4294901760
  %v590 = vsub.f32 %v41, %v589
  %v591 = vand.u32 %v590, 4294901760
  %592 = vmatpush1.msra.mxu0 %v591
  %593 = vmatprep.subr.mxu0 0.0
  %v594 = vand.u32 %v40, 4294901760
  %v595 = vsub.f32 %v40, %v594
  %v596 = vand.u32 %v595, 4294901760
  %597 = vmatpush1.msra.mxu0 %v596
  %598 = vmatprep.subr.mxu0 0.0
  %v599 = vand.u32 %v39, 4294901760
  %v600 = vsub.f32 %v39, %v599
  %v601 = vand.u32 %v600, 4294901760
  %602 = vmatpush1.msra.mxu0 %v601
  %603 = vmatprep.subr.mxu0 0.0
  %v604 = vand.u32 %v38, 4294901760
  %v605 = vsub.f32 %v38, %v604
  %v606 = vand.u32 %v605, 4294901760
  %607 = vmatpush1.msra.mxu0 %v606
  %608 = vmatprep.subr.mxu0 0.0
  %v609 = vand.u32 %v37, 4294901760
  %v610 = vsub.f32 %v37, %v609
  %v611 = vand.u32 %v610, 4294901760
  %612 = vmatpush1.msra.mxu0 %v611
  %613 = vmatprep.subr.mxu0 0.0
  %v614 = vand.u32 %v36, 4294901760
  %v615 = vsub.f32 %v36, %v614
  %v616 = vand.u32 %v615, 4294901760
  %617 = vmatpush1.msra.mxu0 %v616
  %618 = vmatprep.subr.mxu0 0.0
  %v619 = vand.u32 %v35, 4294901760
  %v620 = vsub.f32 %v35, %v619
  %v621 = vand.u32 %v620, 4294901760
  %622 = vmatpush1.msra.mxu0 %v621
  %623 = vmatprep.subr.mxu0 0.0
  %v624 = vand.u32 %v34, 4294901760
  %v625 = vsub.f32 %v34, %v624
  %v626 = vand.u32 %v625, 4294901760
  %627 = vmatpush1.msra.mxu0 %v626
  %628 = vmatprep.subr.mxu0 0.0
  %v629 = vand.u32 %v33, 4294901760
  %v630 = vsub.f32 %v33, %v629
  %v631 = vand.u32 %v630, 4294901760
  %632 = vmatpush1.msra.mxu0 %v631
  %633 = vmatprep.subr.mxu0 0.0
  %v634 = vand.u32 %v32, 4294901760
  %v635 = vsub.f32 %v32, %v634
  %v636 = vand.u32 %v635, 4294901760
  %637 = vmatpush1.msra.mxu0 %v636
  %638 = vmatprep.subr.mxu0 0.0
  %v639 = vand.u32 %v31, 4294901760
  %v640 = vsub.f32 %v31, %v639
  %v641 = vand.u32 %v640, 4294901760
  %642 = vmatpush1.msra.mxu0 %v641
  %643 = vmatprep.subr.mxu0 0.0
  %v644 = vand.u32 %v30, 4294901760
  %v645 = vsub.f32 %v30, %v644
  %v646 = vand.u32 %v645, 4294901760
  %647 = vmatpush1.msra.mxu0 %v646
  %648 = vmatprep.subr.mxu0 0.0
  %v649 = vand.u32 %v29, 4294901760
  %v650 = vsub.f32 %v29, %v649
  %v651 = vand.u32 %v650, 4294901760
  %652 = vmatpush1.msra.mxu0 %v651
  %653 = vmatprep.subr.mxu0 0.0
  %654 = vmatpush2.msra.mxu0 0.0
  %655 = vmatprep.subr.mxu0 0.0
  %656 = vmatpush2.msra.mxu0 0.0
  %657 = vmatprep.subr.mxu0 0.0
  %658 = vmatpush2.msra.mxu0 0.0
  %659 = vmatprep.subr.mxu0 0.0
  %660 = vmatpush2.msra.mxu0 0.0
  %661 = vmatprep.subr.mxu0 0.0
  %662 = vmatpush2.msra.mxu0 0.0
  %663 = vmatprep.subr.mxu0 0.0
  %664 = vmatpush2.msra.mxu0 0.0
  %665 = vmatprep.subr.mxu0 0.0
  %666 = vmatpush2.msra.mxu0 0.0
  %667 = vmatprep.subr.mxu0 0.0
  %668 = vmatpush2.msra.mxu0 0.0
  %669 = vmatprep.subr.mxu0 0.0
  %670 = vmatpush2.msra.mxu0 0.0
  %671 = vmatprep.subr.mxu0 0.0
  %672 = vmatpush2.msra.mxu0 0.0
  %673 = vmatprep.subr.mxu0 0.0
  %674 = vmatpush2.msra.mxu0 0.0
  %675 = vmatprep.subr.mxu0 0.0
  %676 = vmatpush2.msra.mxu0 0.0
  %677 = vmatprep.subr.mxu0 0.0
  %678 = vmatpush2.msra.mxu0 0.0
  %679 = vmatprep.subr.mxu0 0.0
  %680 = vmatpush2.msra.mxu0 0.0
  %681 = vmatprep.subr.mxu0 0.0
  %682 = vmatpush2.msra.mxu0 0.0
  %683 = vmatprep.subr.mxu0 0.0
  %684 = vmatpush2.msra.mxu0 0.0
  %685 = vmatprep.mubr.f32.mxu0 0.0
  %v686 = vand.u32 %v24, 4294901760
  %687 = vmatmul.mubr.f32.gmra.mxu0 %v686
  %v688 = vpop.f32.mrf.mxu0
  %v689 = vadd.f32 %v546, %v688
  %v690 = vpop.f32.mrf.mxu0
  %691 = vmatprep.mubr.f32.mxu0 0.0
  %v692 = vand.u32 %v25, 4294901760
  %693 = vmatmul.mubr.f32.gmra.mxu0 %v692
  %v694 = vpop.f32.mrf.mxu0
  %v695 = vadd.f32 %v554, %v694
  %v696 = vpop.f32.mrf.mxu0
  %697 = vmatprep.mubr.f32.mxu0 0.0
  %v698 = vand.u32 %v26, 4294901760
  %699 = vmatmul.mubr.f32.gmra.mxu0 %v698
  %v700 = vpop.f32.mrf.mxu0
  %v701 = vadd.f32 %v562, %v700
  %v702 = vpop.f32.mrf.mxu0
  %703 = vmatprep.mubr.f32.mxu0 0.0
  %v704 = vand.u32 %v27, 4294901760
  %705 = vmatmul.mubr.f32.gmra.mxu0 %v704
  %v706 = vpop.f32.mrf.mxu0
  %v707 = vadd.f32 %v570, %v706
  %v708 = vpop.f32.mrf.mxu0
  %709 = vdwg.mxu0
  %710 = vmatprep.subr.mxu0 0.0
  %v711 = vand.u32 %v44, 4294901760
  %712 = vmatpush1.msra.mxu0 %v711
  %713 = vmatprep.subr.mxu0 0.0
  %v714 = vand.u32 %v43, 4294901760
  %715 = vmatpush1.msra.mxu0 %v714
  %716 = vmatprep.subr.mxu0 0.0
  %v717 = vand.u32 %v42, 4294901760
  %718 = vmatpush1.msra.mxu0 %v717
  %719 = vmatprep.subr.mxu0 0.0
  %v720 = vand.u32 %v41, 4294901760
  %721 = vmatpush1.msra.mxu0 %v720
  %722 = vmatprep.subr.mxu0 0.0
  %v723 = vand.u32 %v40, 4294901760
  %724 = vmatpush1.msra.mxu0 %v723
  %725 = vmatprep.subr.mxu0 0.0
  %v726 = vand.u32 %v39, 4294901760
  %727 = vmatpush1.msra.mxu0 %v726
  %728 = vmatprep.subr.mxu0 0.0
  %v729 = vand.u32 %v38, 4294901760
  %730 = vmatpush1.msra.mxu0 %v729
  %731 = vmatprep.subr.mxu0 0.0
  %v732 = vand.u32 %v37, 4294901760
  %733 = vmatpush1.msra.mxu0 %v732
  %734 = vmatprep.subr.mxu0 0.0
  %v735 = vand.u32 %v36, 4294901760
  %736 = vmatpush1.msra.mxu0 %v735
  %737 = vmatprep.subr.mxu0 0.0
  %v738 = vand.u32 %v35, 4294901760
  %739 = vmatpush1.msra.mxu0 %v738
  %740 = vmatprep.subr.mxu0 0.0
  %v741 = vand.u32 %v34, 4294901760
  %742 = vmatpush1.msra.mxu0 %v741
  %743 = vmatprep.subr.mxu0 0.0
  %v744 = vand.u32 %v33, 4294901760
  %745 = vmatpush1.msra.mxu0 %v744
  %746 = vmatprep.subr.mxu0 0.0
  %v747 = vand.u32 %v32, 4294901760
  %748 = vmatpush1.msra.mxu0 %v747
  %749 = vmatprep.subr.mxu0 0.0
  %v750 = vand.u32 %v31, 4294901760
  %751 = vmatpush1.msra.mxu0 %v750
  %752 = vmatprep.subr.mxu0 0.0
  %v753 = vand.u32 %v30, 4294901760
  %754 = vmatpush1.msra.mxu0 %v753
  %755 = vmatprep.subr.mxu0 0.0
  %v756 = vand.u32 %v29, 4294901760
  %757 = vmatpush1.msra.mxu0 %v756
  %758 = vmatprep.subr.mxu0 0.0
  %759 = vmatpush2.msra.mxu0 0.0
  %760 = vmatprep.subr.mxu0 0.0
  %761 = vmatpush2.msra.mxu0 0.0
  %762 = vmatprep.subr.mxu0 0.0
  %763 = vmatpush2.msra.mxu0 0.0
  %764 = vmatprep.subr.mxu0 0.0
  %765 = vmatpush2.msra.mxu0 0.0
  %766 = vmatprep.subr.mxu0 0.0
  %767 = vmatpush2.msra.mxu0 0.0
  %768 = vmatprep.subr.mxu0 0.0
  %769 = vmatpush2.msra.mxu0 0.0
  %770 = vmatprep.subr.mxu0 0.0
  %771 = vmatpush2.msra.mxu0 0.0
  %772 = vmatprep.subr.mxu0 0.0
  %773 = vmatpush2.msra.mxu0 0.0
  %774 = vmatprep.subr.mxu0 0.0
  %775 = vmatpush2.msra.mxu0 0.0
  %776 = vmatprep.subr.mxu0 0.0
  %777 = vmatpush2.msra.mxu0 0.0
  %778 = vmatprep.subr.mxu0 0.0
  %779 = vmatpush2.msra.mxu0 0.0
  %780 = vmatprep.subr.mxu0 0.0
  %781 = vmatpush2.msra.mxu0 0.0
  %782 = vmatprep.subr.mxu0 0.0
  %783 = vmatpush2.msra.mxu0 0.0
  %784 = vmatprep.subr.mxu0 0.0
  %785 = vmatpush2.msra.mxu0 0.0
  %786 = vmatprep.subr.mxu0 0.0
  %787 = vmatpush2.msra.mxu0 0.0
  %788 = vmatprep.subr.mxu0 0.0
  %789 = vmatpush2.msra.mxu0 0.0
  %790 = vmatprep.mubr.f32.mxu0 0.0
  %v791 = vand.u32 %v24, 4294901760
  %792 = vmatmul.mubr.f32.gmra.mxu0 %v791
  %v793 = vpop.f32.mrf.mxu0
  %v794 = vadd.f32 %v689, %v793
  %v795 = vpop.f32.mrf.mxu0
  %796 = vmatprep.mubr.f32.mxu0 0.0
  %v797 = vand.u32 %v25, 4294901760
  %798 = vmatmul.mubr.f32.gmra.mxu0 %v797
  %v799 = vpop.f32.mrf.mxu0
  %v800 = vadd.f32 %v695, %v799
  %v801 = vpop.f32.mrf.mxu0
  %802 = vmatprep.mubr.f32.mxu0 0.0
  %v803 = vand.u32 %v26, 4294901760
  %804 = vmatmul.mubr.f32.gmra.mxu0 %v803
  %v805 = vpop.f32.mrf.mxu0
  %v806 = vadd.f32 %v701, %v805
  %v807 = vpop.f32.mrf.mxu0
  %808 = vmatprep.mubr.f32.mxu0 0.0
  %v809 = vand.u32 %v27, 4294901760
  %810 = vmatmul.mubr.f32.gmra.mxu0 %v809
  %v811 = vpop.f32.mrf.mxu0
  %v812 = vadd.f32 %v707, %v811
  %v813 = vpop.f32.mrf.mxu0
  %814 = vdwg.mxu0
  %v815 = vmul.f32 %v24, %v24
  %v816 = vmul.f32 %v25, %v25
  %v817 = vmul.f32 %v26, %v26
  %v818 = vmul.f32 %v27, %v27
  %v819 = vld [vmem:[%s3] sm:$0xff]
  %v820 = vld [vmem:[%s3 + $0x8] sm:$0xff]
  %v821 = vld [vmem:[%s3 + $0x10] sm:$0xff]
  %v822 = vld [vmem:[%s3 + $0x18] sm:$0xff]
  %v823 = vld [vmem:[%s3 + $0x20] sm:$0xff]
  %v824 = vld [vmem:[%s3 + $0x28] sm:$0xff]
  %v825 = vld [vmem:[%s3 + $0x30] sm:$0xff]
  %v826 = vld [vmem:[%s3 + $0x38] sm:$0xff]
  %v827 = vld [vmem:[%s3 + $0x40] sm:$0xff]
  %v828 = vld [vmem:[%s3 + $0x48] sm:$0xff]
  %v829 = vld [vmem:[%s3 + $0x50] sm:$0xff]
  %v830 = vld [vmem:[%s3 + $0x58] sm:$0xff]
  %v831 = vld [vmem:[%s3 + $0x60] sm:$0xff]
  %v832 = vld [vmem:[%s3 + $0x68] sm:$0xff]
  %v833 = vld [vmem:[%s3 + $0x70] sm:$0xff]
  %v834 = vld [vmem:[%s3 + $0x78] sm:$0xff]
  %835 = vmatprep.subr.mxu0 0.0
  %v836 = vand.u32 %v834, 4294901760
  %837 = vmatpush1.msra.mxu0 %v836
  %838 = vmatprep.subr.mxu0 0.0
  %v839 = vand.u32 %v833, 4294901760
  %840 = vmatpush1.msra.mxu0 %v839
  %841 = vmatprep.subr.mxu0 0.0
  %v842 = vand.u32 %v832, 4294901760
  %843 = vmatpush1.msra.mxu0 %v842
  %844 = vmatprep.subr.mxu0 0.0
  %v845 = vand.u32 %v831, 4294901760
  %846 = vmatpush1.msra.mxu0 %v845
  %847 = vmatprep.subr.mxu0 0.0
  %v848 = vand.u32 %v830, 4294901760
  %849 = vmatpush1.msra.mxu0 %v848
  %850 = vmatprep.subr.mxu0 0.0
  %v851 = vand.u32 %v829, 4294901760
  %852 = vmatpush1.msra.mxu0 %v851
  %853 = vmatprep.subr.mxu0 0.0
  %v854 = vand.u32 %v828, 4294901760
  %855 = vmatpush1.msra.mxu0 %v854
  %856 = vmatprep.subr.mxu0 0.0
  %v857 = vand.u32 %v827, 4294901760
  %858 = vmatpush1.msra.mxu0 %v857
  %859 = vmatprep.subr.mxu0 0.0
  %v860 = vand.u32 %v826, 4294901760
  %861 = vmatpush1.msra.mxu0 %v860
  %862 = vmatprep.subr.mxu0 0.0
  %v863 = vand.u32 %v825, 4294901760
  %864 = vmatpush1.msra.mxu0 %v863
  %865 = vmatprep.subr.mxu0 0.0
  %v866 = vand.u32 %v824, 4294901760
  %867 = vmatpush1.msra.mxu0 %v866
  %868 = vmatprep.subr.mxu0 0.0
  %v869 = vand.u32 %v823, 4294901760
  %870 = vmatpush1.msra.mxu0 %v869
  %871 = vmatprep.subr.mxu0 0.0
  %v872 = vand.u32 %v822, 4294901760
  %873 = vmatpush1.msra.mxu0 %v872
  %874 = vmatprep.subr.mxu0 0.0
  %v875 = vand.u32 %v821, 4294901760
  %876 = vmatpush1.msra.mxu0 %v875
  %877 = vmatprep.subr.mxu0 0.0
  %v878 = vand.u32 %v820, 4294901760
  %879 = vmatpush1.msra.mxu0 %v878
  %880 = vmatprep.subr.mxu0 0.0
  %v881 = vand.u32 %v819, 4294901760
  %882 = vmatpush1.msra.mxu0 %v881
  %883 = vmatprep.subr.mxu0 0.0
  %884 = vmatpush2.msra.mxu0 0.0
  %885 = vmatprep.subr.mxu0 0.0
  %886 = vmatpush2.msra.mxu0 0.0
  %887 = vmatprep.subr.mxu0 0.0
  %888 = vmatpush2.msra.mxu0 0.0
  %889 = vmatprep.subr.mxu0 0.0
  %890 = vmatpush2.msra.mxu0 0.0
  %891 = vmatprep.subr.mxu0 0.0
  %892 = vmatpush2.msra.mxu0 0.0
  %893 = vmatprep.subr.mxu0 0.0
  %894 = vmatpush2.msra.mxu0 0.0
  %895 = vmatprep.subr.mxu0 0.0
  %896 = vmatpush2.msra.mxu0 0.0
  %897 = vmatprep.subr.mxu0 0.0
  %898 = vmatpush2.msra.mxu0 0.0
  %899 = vmatprep.subr.mxu0 0.0
  %900 = vmatpush2.msra.mxu0 0.0
  %901 = vmatprep.subr.mxu0 0.0
  %902 = vmatpush2.msra.mxu0 0.0
  %903 = vmatprep.subr.mxu0 0.0
  %904 = vmatpush2.msra.mxu0 0.0
  %905 = vmatprep.subr.mxu0 0.0
  %906 = vmatpush2.msra.mxu0 0.0
  %907 = vmatprep.subr.mxu0 0.0
  %908 = vmatpush2.msra.mxu0 0.0
  %909 = vmatprep.subr.mxu0 0.0
  %910 = vmatpush2.msra.mxu0 0.0
  %911 = vmatprep.subr.mxu0 0.0
  %912 = vmatpush2.msra.mxu0 0.0
  %913 = vmatprep.subr.mxu0 0.0
  %914 = vmatpush2.msra.mxu0 0.0
  %915 = vmatprep.mubr.f32.mxu0 0.0
  %v916 = vand.u32 %v815, 4294901760
  %v917 = vsub.f32 %v815, %v916
  %v918 = vand.u32 %v917, 4294901760
  %v919 = vsub.f32 %v917, %v918
  %v920 = vand.u32 %v919, 4294901760
  %921 = vmatmul.mubr.f32.gmra.mxu0 %v920
  %v922 = vpop.f32.mrf.mxu0
  %v923 = vadd.f32 0.0, %v922
  %v924 = vpop.f32.mrf.mxu0
  %925 = vmatprep.mubr.f32.mxu0 0.0
  %v926 = vand.u32 %v816, 4294901760
  %v927 = vsub.f32 %v816, %v926
  %v928 = vand.u32 %v927, 4294901760
  %v929 = vsub.f32 %v927, %v928
  %v930 = vand.u32 %v929, 4294901760
  %931 = vmatmul.mubr.f32.gmra.mxu0 %v930
  %v932 = vpop.f32.mrf.mxu0
  %v933 = vadd.f32 0.0, %v932
  %v934 = vpop.f32.mrf.mxu0
  %935 = vmatprep.mubr.f32.mxu0 0.0
  %v936 = vand.u32 %v817, 4294901760
  %v937 = vsub.f32 %v817, %v936
  %v938 = vand.u32 %v937, 4294901760
  %v939 = vsub.f32 %v937, %v938
  %v940 = vand.u32 %v939, 4294901760
  %941 = vmatmul.mubr.f32.gmra.mxu0 %v940
  %v942 = vpop.f32.mrf.mxu0
  %v943 = vadd.f32 0.0, %v942
  %v944 = vpop.f32.mrf.mxu0
  %945 = vmatprep.mubr.f32.mxu0 0.0
  %v946 = vand.u32 %v818, 4294901760
  %v947 = vsub.f32 %v818, %v946
  %v948 = vand.u32 %v947, 4294901760
  %v949 = vsub.f32 %v947, %v948
  %v950 = vand.u32 %v949, 4294901760
  %951 = vmatmul.mubr.f32.gmra.mxu0 %v950
  %v952 = vpop.f32.mrf.mxu0
  %v953 = vadd.f32 0.0, %v952
  %v954 = vpop.f32.mrf.mxu0
  %955 = vdwg.mxu0
  %956 = vmatprep.subr.mxu0 0.0
  %v957 = vand.u32 %v834, 4294901760
  %v958 = vsub.f32 %v834, %v957
  %v959 = vand.u32 %v958, 4294901760
  %v960 = vsub.f32 %v958, %v959
  %v961 = vand.u32 %v960, 4294901760
  %962 = vmatpush1.msra.mxu0 %v961
  %963 = vmatprep.subr.mxu0 0.0
  %v964 = vand.u32 %v833, 4294901760
  %v965 = vsub.f32 %v833, %v964
  %v966 = vand.u32 %v965, 4294901760
  %v967 = vsub.f32 %v965, %v966
  %v968 = vand.u32 %v967, 4294901760
  %969 = vmatpush1.msra.mxu0 %v968
  %970 = vmatprep.subr.mxu0 0.0
  %v971 = vand.u32 %v832, 4294901760
  %v972 = vsub.f32 %v832, %v971
  %v973 = vand.u32 %v972, 4294901760
  %v974 = vsub.f32 %v972, %v973
  %v975 = vand.u32 %v974, 4294901760
  %976 = vmatpush1.msra.mxu0 %v975
  %977 = vmatprep.subr.mxu0 0.0
  %v978 = vand.u32 %v831, 4294901760
  %v979 = vsub.f32 %v831, %v978
  %v980 = vand.u32 %v979, 4294901760
  %v981 = vsub.f32 %v979, %v980
  %v982 = vand.u32 %v981, 4294901760
  %983 = vmatpush1.msra.mxu0 %v982
  %984 = vmatprep.subr.mxu0 0.0
  %v985 = vand.u32 %v830, 4294901760
  %v986 = vsub.f32 %v830, %v985
  %v987 = vand.u32 %v986, 4294901760
  %v988 = vsub.f32 %v986, %v987
  %v989 = vand.u32 %v988, 4294901760
  %990 = vmatpush1.msra.mxu0 %v989
  %991 = vmatprep.subr.mxu0 0.0
  %v992 = vand.u32 %v829, 4294901760
  %v993 = vsub.f32 %v829, %v992
  %v994 = vand.u32 %v993, 4294901760
  %v995 = vsub.f32 %v993, %v994
  %v996 = vand.u32 %v995, 4294901760
  %997 = vmatpush1.msra.mxu0 %v996
  %998 = vmatprep.subr.mxu0 0.0
  %v999 = vand.u32 %v828, 4294901760
  %v1000 = vsub.f32 %v828, %v999
  %v1001 = vand.u32 %v1000, 4294901760
  %v1002 = vsub.f32 %v1000, %v1001
  %v1003 = vand.u32 %v1002, 4294901760
  %1004 = vmatpush1.msra.mxu0 %v1003
  %1005 = vmatprep.subr.mxu0 0.0
  %v1006 = vand.u32 %v827, 4294901760
  %v1007 = vsub.f32 %v827, %v1006
  %v1008 = vand.u32 %v1007, 4294901760
  %v1009 = vsub.f32 %v1007, %v1008
  %v1010 = vand.u32 %v1009, 4294901760
  %1011 = vmatpush1.msra.mxu0 %v1010
  %1012 = vmatprep.subr.mxu0 0.0
  %v1013 = vand.u32 %v826, 4294901760
  %v1014 = vsub.f32 %v826, %v1013
  %v1015 = vand.u32 %v1014, 4294901760
  %v1016 = vsub.f32 %v1014, %v1015
  %v1017 = vand.u32 %v1016, 4294901760
  %1018 = vmatpush1.msra.mxu0 %v1017
  %1019 = vmatprep.subr.mxu0 0.0
  %v1020 = vand.u32 %v825, 4294901760
  %v1021 = vsub.f32 %v825, %v1020
  %v1022 = vand.u32 %v1021, 4294901760
  %v1023 = vsub.f32 %v1021, %v1022
  %v1024 = vand.u32 %v1023, 4294901760
  %1025 = vmatpush1.msra.mxu0 %v1024
  %1026 = vmatprep.subr.mxu0 0.0
  %v1027 = vand.u32 %v824, 4294901760
  %v1028 = vsub.f32 %v824, %v1027
  %v1029 = vand.u32 %v1028, 4294901760
  %v1030 = vsub.f32 %v1028, %v1029
  %v1031 = vand.u32 %v1030, 4294901760
  %1032 = vmatpush1.msra.mxu0 %v1031
  %1033 = vmatprep.subr.mxu0 0.0
  %v1034 = vand.u32 %v823, 4294901760
  %v1035 = vsub.f32 %v823, %v1034
  %v1036 = vand.u32 %v1035, 4294901760
  %v1037 = vsub.f32 %v1035, %v1036
  %v1038 = vand.u32 %v1037, 4294901760
  %1039 = vmatpush1.msra.mxu0 %v1038
  %1040 = vmatprep.subr.mxu0 0.0
  %v1041 = vand.u32 %v822, 4294901760
  %v1042 = vsub.f32 %v822, %v1041
  %v1043 = vand.u32 %v1042, 4294901760
  %v1044 = vsub.f32 %v1042, %v1043
  %v1045 = vand.u32 %v1044, 4294901760
  %1046 = vmatpush1.msra.mxu0 %v1045
  %1047 = vmatprep.subr.mxu0 0.0
  %v1048 = vand.u32 %v821, 4294901760
  %v1049 = vsub.f32 %v821, %v1048
  %v1050 = vand.u32 %v1049, 4294901760
  %v1051 = vsub.f32 %v1049, %v1050
  %v1052 = vand.u32 %v1051, 4294901760
  %1053 = vmatpush1.msra.mxu0 %v1052
  %1054 = vmatprep.subr.mxu0 0.0
  %v1055 = vand.u32 %v820, 4294901760
  %v1056 = vsub.f32 %v820, %v1055
  %v1057 = vand.u32 %v1056, 4294901760
  %v1058 = vsub.f32 %v1056, %v1057
  %v1059 = vand.u32 %v1058, 4294901760
  %1060 = vmatpush1.msra.mxu0 %v1059
  %1061 = vmatprep.subr.mxu0 0.0
  %v1062 = vand.u32 %v819, 4294901760
  %v1063 = vsub.f32 %v819, %v1062
  %v1064 = vand.u32 %v1063, 4294901760
  %v1065 = vsub.f32 %v1063, %v1064
  %v1066 = vand.u32 %v1065, 4294901760
  %1067 = vmatpush1.msra.mxu0 %v1066
  %1068 = vmatprep.subr.mxu0 0.0
  %1069 = vmatpush2.msra.mxu0 0.0
  %1070 = vmatprep.subr.mxu0 0.0
  %1071 = vmatpush2.msra.mxu0 0.0
  %1072 = vmatprep.subr.mxu0 0.0
  %1073 = vmatpush2.msra.mxu0 0.0
  %1074 = vmatprep.subr.mxu0 0.0
  %1075 = vmatpush2.msra.mxu0 0.0
  %1076 = vmatprep.subr.mxu0 0.0
  %1077 = vmatpush2.msra.mxu0 0.0
  %1078 = vmatprep.subr.mxu0 0.0
  %1079 = vmatpush2.msra.mxu0 0.0
  %1080 = vmatprep.subr.mxu0 0.0
  %1081 = vmatpush2.msra.mxu0 0.0
  %1082 = vmatprep.subr.mxu0 0.0
  %1083 = vmatpush2.msra.mxu0 0.0
  %1084 = vmatprep.subr.mxu0 0.0
  %1085 = vmatpush2.msra.mxu0 0.0
  %1086 = vmatprep.subr.mxu0 0.0
  %1087 = vmatpush2.msra.mxu0 0.0
  %1088 = vmatprep.subr.mxu0 0.0
  %1089 = vmatpush2.msra.mxu0 0.0
  %1090 = vmatprep.subr.mxu0 0.0
  %1091 = vmatpush2.msra.mxu0 0.0
  %1092 = vmatprep.subr.mxu0 0.0
  %1093 = vmatpush2.msra.mxu0 0.0
  %1094 = vmatprep.subr.mxu0 0.0
  %1095 = vmatpush2.msra.mxu0 0.0
  %1096 = vmatprep.subr.mxu0 0.0
  %1097 = vmatpush2.msra.mxu0 0.0
  %1098 = vmatprep.subr.mxu0 0.0
  %1099 = vmatpush2.msra.mxu0 0.0
  %1100 = vmatprep.mubr.f32.mxu0 0.0
  %v1101 = vand.u32 %v815, 4294901760
  %1102 = vmatmul.mubr.f32.gmra.mxu0 %v1101
  %v1103 = vpop.f32.mrf.mxu0
  %v1104 = vadd.f32 %v923, %v1103
  %v1105 = vpop.f32.mrf.mxu0
  %1106 = vmatprep.mubr.f32.mxu0 0.0
  %v1107 = vand.u32 %v816, 4294901760
  %1108 = vmatmul.mubr.f32.gmra.mxu0 %v1107
  %v1109 = vpop.f32.mrf.mxu0
  %v1110 = vadd.f32 %v933, %v1109
  %v1111 = vpop.f32.mrf.mxu0
  %1112 = vmatprep.mubr.f32.mxu0 0.0
  %v1113 = vand.u32 %v817, 4294901760
  %1114 = vmatmul.mubr.f32.gmra.mxu0 %v1113
  %v1115 = vpop.f32.mrf.mxu0
  %v1116 = vadd.f32 %v943, %v1115
  %v1117 = vpop.f32.mrf.mxu0
  %1118 = vmatprep.mubr.f32.mxu0 0.0
  %v1119 = vand.u32 %v818, 4294901760
  %1120 = vmatmul.mubr.f32.gmra.mxu0 %v1119
  %v1121 = vpop.f32.mrf.mxu0
  %v1122 = vadd.f32 %v953, %v1121
  %v1123 = vpop.f32.mrf.mxu0
  %1124 = vdwg.mxu0
  %1125 = vmatprep.subr.mxu0 0.0
  %v1126 = vand.u32 %v834, 4294901760
  %v1127 = vsub.f32 %v834, %v1126
  %1128 = vmatpush1.msra.mxu0 %v1127
  %1129 = vmatprep.subr.mxu0 0.0
  %v1130 = vand.u32 %v833, 4294901760
  %v1131 = vsub.f32 %v833, %v1130
  %1132 = vmatpush1.msra.mxu0 %v1131
  %1133 = vmatprep.subr.mxu0 0.0
  %v1134 = vand.u32 %v832, 4294901760
  %v1135 = vsub.f32 %v832, %v1134
  %1136 = vmatpush1.msra.mxu0 %v1135
  %1137 = vmatprep.subr.mxu0 0.0
  %v1138 = vand.u32 %v831, 4294901760
  %v1139 = vsub.f32 %v831, %v1138
  %1140 = vmatpush1.msra.mxu0 %v1139
  %1141 = vmatprep.subr.mxu0 0.0
  %v1142 = vand.u32 %v830, 4294901760
  %v1143 = vsub.f32 %v830, %v1142
  %1144 = vmatpush1.msra.mxu0 %v1143
  %1145 = vmatprep.subr.mxu0 0.0
  %v1146 = vand.u32 %v829, 4294901760
  %v1147 = vsub.f32 %v829, %v1146
  %1148 = vmatpush1.msra.mxu0 %v1147
  %1149 = vmatprep.subr.mxu0 0.0
  %v1150 = vand.u32 %v828, 4294901760
  %v1151 = vsub.f32 %v828, %v1150
  %1152 = vmatpush1.msra.mxu0 %v1151
  %1153 = vmatprep.subr.mxu0 0.0
  %v1154 = vand.u32 %v827, 4294901760
  %v1155 = vsub.f32 %v827, %v1154
  %1156 = vmatpush1.msra.mxu0 %v1155
  %1157 = vmatprep.subr.mxu0 0.0
  %v1158 = vand.u32 %v826, 4294901760
  %v1159 = vsub.f32 %v826, %v1158
  %1160 = vmatpush1.msra.mxu0 %v1159
  %1161 = vmatprep.subr.mxu0 0.0
  %v1162 = vand.u32 %v825, 4294901760
  %v1163 = vsub.f32 %v825, %v1162
  %1164 = vmatpush1.msra.mxu0 %v1163
  %1165 = vmatprep.subr.mxu0 0.0
  %v1166 = vand.u32 %v824, 4294901760
  %v1167 = vsub.f32 %v824, %v1166
  %1168 = vmatpush1.msra.mxu0 %v1167
  %1169 = vmatprep.subr.mxu0 0.0
  %v1170 = vand.u32 %v823, 4294901760
  %v1171 = vsub.f32 %v823, %v1170
  %1172 = vmatpush1.msra.mxu0 %v1171
  %1173 = vmatprep.subr.mxu0 0.0
  %v1174 = vand.u32 %v822, 4294901760
  %v1175 = vsub.f32 %v822, %v1174
  %1176 = vmatpush1.msra.mxu0 %v1175
  %1177 = vmatprep.subr.mxu0 0.0
  %v1178 = vand.u32 %v821, 4294901760
  %v1179 = vsub.f32 %v821, %v1178
  %1180 = vmatpush1.msra.mxu0 %v1179
  %1181 = vmatprep.subr.mxu0 0.0
  %v1182 = vand.u32 %v820, 4294901760
  %v1183 = vsub.f32 %v820, %v1182
  %1184 = vmatpush1.msra.mxu0 %v1183
  %1185 = vmatprep.subr.mxu0 0.0
  %v1186 = vand.u32 %v819, 4294901760
  %v1187 = vsub.f32 %v819, %v1186
  %1188 = vmatpush1.msra.mxu0 %v1187
  %1189 = vmatprep.subr.mxu0 0.0
  %1190 = vmatpush2.msra.mxu0 0.0
  %1191 = vmatprep.subr.mxu0 0.0
  %1192 = vmatpush2.msra.mxu0 0.0
  %1193 = vmatprep.subr.mxu0 0.0
  %1194 = vmatpush2.msra.mxu0 0.0
  %1195 = vmatprep.subr.mxu0 0.0
  %1196 = vmatpush2.msra.mxu0 0.0
  %1197 = vmatprep.subr.mxu0 0.0
  %1198 = vmatpush2.msra.mxu0 0.0
  %1199 = vmatprep.subr.mxu0 0.0
  %1200 = vmatpush2.msra.mxu0 0.0
  %1201 = vmatprep.subr.mxu0 0.0
  %1202 = vmatpush2.msra.mxu0 0.0
  %1203 = vmatprep.subr.mxu0 0.0
  %1204 = vmatpush2.msra.mxu0 0.0
  %1205 = vmatprep.subr.mxu0 0.0
  %1206 = vmatpush2.msra.mxu0 0.0
  %1207 = vmatprep.subr.mxu0 0.0
  %1208 = vmatpush2.msra.mxu0 0.0
  %1209 = vmatprep.subr.mxu0 0.0
  %1210 = vmatpush2.msra.mxu0 0.0
  %1211 = vmatprep.subr.mxu0 0.0
  %1212 = vmatpush2.msra.mxu0 0.0
  %1213 = vmatprep.subr.mxu0 0.0
  %1214 = vmatpush2.msra.mxu0 0.0
  %1215 = vmatprep.subr.mxu0 0.0
  %1216 = vmatpush2.msra.mxu0 0.0
  %1217 = vmatprep.subr.mxu0 0.0
  %1218 = vmatpush2.msra.mxu0 0.0
  %1219 = vmatprep.subr.mxu0 0.0
  %1220 = vmatpush2.msra.mxu0 0.0
  %1221 = vmatprep.mubr.f32.mxu0 0.0
  %v1222 = vand.u32 %v815, 4294901760
  %v1223 = vsub.f32 %v815, %v1222
  %1224 = vmatmul.mubr.f32.gmra.mxu0 %v1223
  %v1225 = vpop.f32.mrf.mxu0
  %v1226 = vadd.f32 %v1104, %v1225
  %v1227 = vpop.f32.mrf.mxu0
  %1228 = vmatprep.mubr.f32.mxu0 0.0
  %v1229 = vand.u32 %v816, 4294901760
  %v1230 = vsub.f32 %v816, %v1229
  %1231 = vmatmul.mubr.f32.gmra.mxu0 %v1230
  %v1232 = vpop.f32.mrf.mxu0
  %v1233 = vadd.f32 %v1110, %v1232
  %v1234 = vpop.f32.mrf.mxu0
  %1235 = vmatprep.mubr.f32.mxu0 0.0
  %v1236 = vand.u32 %v817, 4294901760
  %v1237 = vsub.f32 %v817, %v1236
  %1238 = vmatmul.mubr.f32.gmra.mxu0 %v1237
  %v1239 = vpop.f32.mrf.mxu0
  %v1240 = vadd.f32 %v1116, %v1239
  %v1241 = vpop.f32.mrf.mxu0
  %1242 = vmatprep.mubr.f32.mxu0 0.0
  %v1243 = vand.u32 %v818, 4294901760
  %v1244 = vsub.f32 %v818, %v1243
  %1245 = vmatmul.mubr.f32.gmra.mxu0 %v1244
  %v1246 = vpop.f32.mrf.mxu0
  %v1247 = vadd.f32 %v1122, %v1246
  %v1248 = vpop.f32.mrf.mxu0
  %1249 = vdwg.mxu0
  %1250 = vmatprep.subr.mxu0 0.0
  %v1251 = vand.u32 %v834, 4294901760
  %1252 = vmatpush1.msra.mxu0 %v1251
  %1253 = vmatprep.subr.mxu0 0.0
  %v1254 = vand.u32 %v833, 4294901760
  %1255 = vmatpush1.msra.mxu0 %v1254
  %1256 = vmatprep.subr.mxu0 0.0
  %v1257 = vand.u32 %v832, 4294901760
  %1258 = vmatpush1.msra.mxu0 %v1257
  %1259 = vmatprep.subr.mxu0 0.0
  %v1260 = vand.u32 %v831, 4294901760
  %1261 = vmatpush1.msra.mxu0 %v1260
  %1262 = vmatprep.subr.mxu0 0.0
  %v1263 = vand.u32 %v830, 4294901760
  %1264 = vmatpush1.msra.mxu0 %v1263
  %1265 = vmatprep.subr.mxu0 0.0
  %v1266 = vand.u32 %v829, 4294901760
  %1267 = vmatpush1.msra.mxu0 %v1266
  %1268 = vmatprep.subr.mxu0 0.0
  %v1269 = vand.u32 %v828, 4294901760
  %1270 = vmatpush1.msra.mxu0 %v1269
  %1271 = vmatprep.subr.mxu0 0.0
  %v1272 = vand.u32 %v827, 4294901760
  %1273 = vmatpush1.msra.mxu0 %v1272
  %1274 = vmatprep.subr.mxu0 0.0
  %v1275 = vand.u32 %v826, 4294901760
  %1276 = vmatpush1.msra.mxu0 %v1275
  %1277 = vmatprep.subr.mxu0 0.0
  %v1278 = vand.u32 %v825, 4294901760
  %1279 = vmatpush1.msra.mxu0 %v1278
  %1280 = vmatprep.subr.mxu0 0.0
  %v1281 = vand.u32 %v824, 4294901760
  %1282 = vmatpush1.msra.mxu0 %v1281
  %1283 = vmatprep.subr.mxu0 0.0
  %v1284 = vand.u32 %v823, 4294901760
  %1285 = vmatpush1.msra.mxu0 %v1284
  %1286 = vmatprep.subr.mxu0 0.0
  %v1287 = vand.u32 %v822, 4294901760
  %1288 = vmatpush1.msra.mxu0 %v1287
  %1289 = vmatprep.subr.mxu0 0.0
  %v1290 = vand.u32 %v821, 4294901760
  %1291 = vmatpush1.msra.mxu0 %v1290
  %1292 = vmatprep.subr.mxu0 0.0
  %v1293 = vand.u32 %v820, 4294901760
  %1294 = vmatpush1.msra.mxu0 %v1293
  %1295 = vmatprep.subr.mxu0 0.0
  %v1296 = vand.u32 %v819, 4294901760
  %1297 = vmatpush1.msra.mxu0 %v1296
  %1298 = vmatprep.subr.mxu0 0.0
  %1299 = vmatpush2.msra.mxu0 0.0
  %1300 = vmatprep.subr.mxu0 0.0
  %1301 = vmatpush2.msra.mxu0 0.0
  %1302 = vmatprep.subr.mxu0 0.0
  %1303 = vmatpush2.msra.mxu0 0.0
  %1304 = vmatprep.subr.mxu0 0.0
  %1305 = vmatpush2.msra.mxu0 0.0
  %1306 = vmatprep.subr.mxu0 0.0
  %1307 = vmatpush2.msra.mxu0 0.0
  %1308 = vmatprep.subr.mxu0 0.0
  %1309 = vmatpush2.msra.mxu0 0.0
  %1310 = vmatprep.subr.mxu0 0.0
  %1311 = vmatpush2.msra.mxu0 0.0
  %1312 = vmatprep.subr.mxu0 0.0
  %1313 = vmatpush2.msra.mxu0 0.0
  %1314 = vmatprep.subr.mxu0 0.0
  %1315 = vmatpush2.msra.mxu0 0.0
  %1316 = vmatprep.subr.mxu0 0.0
  %1317 = vmatpush2.msra.mxu0 0.0
  %1318 = vmatprep.subr.mxu0 0.0
  %1319 = vmatpush2.msra.mxu0 0.0
  %1320 = vmatprep.subr.mxu0 0.0
  %1321 = vmatpush2.msra.mxu0 0.0
  %1322 = vmatprep.subr.mxu0 0.0
  %1323 = vmatpush2.msra.mxu0 0.0
  %1324 = vmatprep.subr.mxu0 0.0
  %1325 = vmatpush2.msra.mxu0 0.0
  %1326 = vmatprep.subr.mxu0 0.0
  %1327 = vmatpush2.msra.mxu0 0.0
  %1328 = vmatprep.subr.mxu0 0.0
  %1329 = vmatpush2.msra.mxu0 0.0
  %1330 = vmatprep.mubr.f32.mxu0 0.0
  %v1331 = vand.u32 %v815, 4294901760
  %v1332 = vsub.f32 %v815, %v1331
  %v1333 = vand.u32 %v1332, 4294901760
  %1334 = vmatmul.mubr.f32.gmra.mxu0 %v1333
  %v1335 = vpop.f32.mrf.mxu0
  %v1336 = vadd.f32 %v1226, %v1335
  %v1337 = vpop.f32.mrf.mxu0
  %1338 = vmatprep.mubr.f32.mxu0 0.0
  %v1339 = vand.u32 %v816, 4294901760
  %v1340 = vsub.f32 %v816, %v1339
  %v1341 = vand.u32 %v1340, 4294901760
  %1342 = vmatmul.mubr.f32.gmra.mxu0 %v1341
  %v1343 = vpop.f32.mrf.mxu0
  %v1344 = vadd.f32 %v1233, %v1343
  %v1345 = vpop.f32.mrf.mxu0
  %1346 = vmatprep.mubr.f32.mxu0 0.0
  %v1347 = vand.u32 %v817, 4294901760
  %v1348 = vsub.f32 %v817, %v1347
  %v1349 = vand.u32 %v1348, 4294901760
  %1350 = vmatmul.mubr.f32.gmra.mxu0 %v1349
  %v1351 = vpop.f32.mrf.mxu0
  %v1352 = vadd.f32 %v1240, %v1351
  %v1353 = vpop.f32.mrf.mxu0
  %1354 = vmatprep.mubr.f32.mxu0 0.0
  %v1355 = vand.u32 %v818, 4294901760
  %v1356 = vsub.f32 %v818, %v1355
  %v1357 = vand.u32 %v1356, 4294901760
  %1358 = vmatmul.mubr.f32.gmra.mxu0 %v1357
  %v1359 = vpop.f32.mrf.mxu0
  %v1360 = vadd.f32 %v1247, %v1359
  %v1361 = vpop.f32.mrf.mxu0
  %1362 = vdwg.mxu0
  %1363 = vmatprep.subr.mxu0 0.0
  %v1364 = vand.u32 %v834, 4294901760
  %v1365 = vsub.f32 %v834, %v1364
  %v1366 = vand.u32 %v1365, 4294901760
  %1367 = vmatpush1.msra.mxu0 %v1366
  %1368 = vmatprep.subr.mxu0 0.0
  %v1369 = vand.u32 %v833, 4294901760
  %v1370 = vsub.f32 %v833, %v1369
  %v1371 = vand.u32 %v1370, 4294901760
  %1372 = vmatpush1.msra.mxu0 %v1371
  %1373 = vmatprep.subr.mxu0 0.0
  %v1374 = vand.u32 %v832, 4294901760
  %v1375 = vsub.f32 %v832, %v1374
  %v1376 = vand.u32 %v1375, 4294901760
  %1377 = vmatpush1.msra.mxu0 %v1376
  %1378 = vmatprep.subr.mxu0 0.0
  %v1379 = vand.u32 %v831, 4294901760
  %v1380 = vsub.f32 %v831, %v1379
  %v1381 = vand.u32 %v1380, 4294901760
  %1382 = vmatpush1.msra.mxu0 %v1381
  %1383 = vmatprep.subr.mxu0 0.0
  %v1384 = vand.u32 %v830, 4294901760
  %v1385 = vsub.f32 %v830, %v1384
  %v1386 = vand.u32 %v1385, 4294901760
  %1387 = vmatpush1.msra.mxu0 %v1386
  %1388 = vmatprep.subr.mxu0 0.0
  %v1389 = vand.u32 %v829, 4294901760
  %v1390 = vsub.f32 %v829, %v1389
  %v1391 = vand.u32 %v1390, 4294901760
  %1392 = vmatpush1.msra.mxu0 %v1391
  %1393 = vmatprep.subr.mxu0 0.0
  %v1394 = vand.u32 %v828, 4294901760
  %v1395 = vsub.f32 %v828, %v1394
  %v1396 = vand.u32 %v1395, 4294901760
  %1397 = vmatpush1.msra.mxu0 %v1396
  %1398 = vmatprep.subr.mxu0 0.0
  %v1399 = vand.u32 %v827, 4294901760
  %v1400 = vsub.f32 %v827, %v1399
  %v1401 = vand.u32 %v1400, 4294901760
  %1402 = vmatpush1.msra.mxu0 %v1401
  %1403 = vmatprep.subr.mxu0 0.0
  %v1404 = vand.u32 %v826, 4294901760
  %v1405 = vsub.f32 %v826, %v1404
  %v1406 = vand.u32 %v1405, 4294901760
  %1407 = vmatpush1.msra.mxu0 %v1406
  %1408 = vmatprep.subr.mxu0 0.0
  %v1409 = vand.u32 %v825, 4294901760
  %v1410 = vsub.f32 %v825, %v1409
  %v1411 = vand.u32 %v1410, 4294901760
  %1412 = vmatpush1.msra.mxu0 %v1411
  %1413 = vmatprep.subr.mxu0 0.0
  %v1414 = vand.u32 %v824, 4294901760
  %v1415 = vsub.f32 %v824, %v1414
  %v1416 = vand.u32 %v1415, 4294901760
  %1417 = vmatpush1.msra.mxu0 %v1416
  %1418 = vmatprep.subr.mxu0 0.0
  %v1419 = vand.u32 %v823, 4294901760
  %v1420 = vsub.f32 %v823, %v1419
  %v1421 = vand.u32 %v1420, 4294901760
  %1422 = vmatpush1.msra.mxu0 %v1421
  %1423 = vmatprep.subr.mxu0 0.0
  %v1424 = vand.u32 %v822, 4294901760
  %v1425 = vsub.f32 %v822, %v1424
  %v1426 = vand.u32 %v1425, 4294901760
  %1427 = vmatpush1.msra.mxu0 %v1426
  %1428 = vmatprep.subr.mxu0 0.0
  %v1429 = vand.u32 %v821, 4294901760
  %v1430 = vsub.f32 %v821, %v1429
  %v1431 = vand.u32 %v1430, 4294901760
  %1432 = vmatpush1.msra.mxu0 %v1431
  %1433 = vmatprep.subr.mxu0 0.0
  %v1434 = vand.u32 %v820, 4294901760
  %v1435 = vsub.f32 %v820, %v1434
  %v1436 = vand.u32 %v1435, 4294901760
  %1437 = vmatpush1.msra.mxu0 %v1436
  %1438 = vmatprep.subr.mxu0 0.0
  %v1439 = vand.u32 %v819, 4294901760
  %v1440 = vsub.f32 %v819, %v1439
  %v1441 = vand.u32 %v1440, 4294901760
  %1442 = vmatpush1.msra.mxu0 %v1441
  %1443 = vmatprep.subr.mxu0 0.0
  %1444 = vmatpush2.msra.mxu0 0.0
  %1445 = vmatprep.subr.mxu0 0.0
  %1446 = vmatpush2.msra.mxu0 0.0
  %1447 = vmatprep.subr.mxu0 0.0
  %1448 = vmatpush2.msra.mxu0 0.0
  %1449 = vmatprep.subr.mxu0 0.0
  %1450 = vmatpush2.msra.mxu0 0.0
  %1451 = vmatprep.subr.mxu0 0.0
  %1452 = vmatpush2.msra.mxu0 0.0
  %1453 = vmatprep.subr.mxu0 0.0
  %1454 = vmatpush2.msra.mxu0 0.0
  %1455 = vmatprep.subr.mxu0 0.0
  %1456 = vmatpush2.msra.mxu0 0.0
  %1457 = vmatprep.subr.mxu0 0.0
  %1458 = vmatpush2.msra.mxu0 0.0
  %1459 = vmatprep.subr.mxu0 0.0
  %1460 = vmatpush2.msra.mxu0 0.0
  %1461 = vmatprep.subr.mxu0 0.0
  %1462 = vmatpush2.msra.mxu0 0.0
  %1463 = vmatprep.subr.mxu0 0.0
  %1464 = vmatpush2.msra.mxu0 0.0
  %1465 = vmatprep.subr.mxu0 0.0
  %1466 = vmatpush2.msra.mxu0 0.0
  %1467 = vmatprep.subr.mxu0 0.0
  %1468 = vmatpush2.msra.mxu0 0.0
  %1469 = vmatprep.subr.mxu0 0.0
  %1470 = vmatpush2.msra.mxu0 0.0
  %1471 = vmatprep.subr.mxu0 0.0
  %1472 = vmatpush2.msra.mxu0 0.0
  %1473 = vmatprep.subr.mxu0 0.0
  %1474 = vmatpush2.msra.mxu0 0.0
  %1475 = vmatprep.mubr.f32.mxu0 0.0
  %v1476 = vand.u32 %v815, 4294901760
  %1477 = vmatmul.mubr.f32.gmra.mxu0 %v1476
  %v1478 = vpop.f32.mrf.mxu0
  %v1479 = vadd.f32 %v1336, %v1478
  %v1480 = vpop.f32.mrf.mxu0
  %1481 = vmatprep.mubr.f32.mxu0 0.0
  %v1482 = vand.u32 %v816, 4294901760
  %1483 = vmatmul.mubr.f32.gmra.mxu0 %v1482
  %v1484 = vpop.f32.mrf.mxu0
  %v1485 = vadd.f32 %v1344, %v1484
  %v1486 = vpop.f32.mrf.mxu0
  %1487 = vmatprep.mubr.f32.mxu0 0.0
  %v1488 = vand.u32 %v817, 4294901760
  %1489 = vmatmul.mubr.f32.gmra.mxu0 %v1488
  %v1490 = vpop.f32.mrf.mxu0
  %v1491 = vadd.f32 %v1352, %v1490
  %v1492 = vpop.f32.mrf.mxu0
  %1493 = vmatprep.mubr.f32.mxu0 0.0
  %v1494 = vand.u32 %v818, 4294901760
  %1495 = vmatmul.mubr.f32.gmra.mxu0 %v1494
  %v1496 = vpop.f32.mrf.mxu0
  %v1497 = vadd.f32 %v1360, %v1496
  %v1498 = vpop.f32.mrf.mxu0
  %1499 = vdwg.mxu0
  %1500 = vmatprep.subr.mxu0 0.0
  %v1501 = vand.u32 %v834, 4294901760
  %1502 = vmatpush1.msra.mxu0 %v1501
  %1503 = vmatprep.subr.mxu0 0.0
  %v1504 = vand.u32 %v833, 4294901760
  %1505 = vmatpush1.msra.mxu0 %v1504
  %1506 = vmatprep.subr.mxu0 0.0
  %v1507 = vand.u32 %v832, 4294901760
  %1508 = vmatpush1.msra.mxu0 %v1507
  %1509 = vmatprep.subr.mxu0 0.0
  %v1510 = vand.u32 %v831, 4294901760
  %1511 = vmatpush1.msra.mxu0 %v1510
  %1512 = vmatprep.subr.mxu0 0.0
  %v1513 = vand.u32 %v830, 4294901760
  %1514 = vmatpush1.msra.mxu0 %v1513
  %1515 = vmatprep.subr.mxu0 0.0
  %v1516 = vand.u32 %v829, 4294901760
  %1517 = vmatpush1.msra.mxu0 %v1516
  %1518 = vmatprep.subr.mxu0 0.0
  %v1519 = vand.u32 %v828, 4294901760
  %1520 = vmatpush1.msra.mxu0 %v1519
  %1521 = vmatprep.subr.mxu0 0.0
  %v1522 = vand.u32 %v827, 4294901760
  %1523 = vmatpush1.msra.mxu0 %v1522
  %1524 = vmatprep.subr.mxu0 0.0
  %v1525 = vand.u32 %v826, 4294901760
  %1526 = vmatpush1.msra.mxu0 %v1525
  %1527 = vmatprep.subr.mxu0 0.0
  %v1528 = vand.u32 %v825, 4294901760
  %1529 = vmatpush1.msra.mxu0 %v1528
  %1530 = vmatprep.subr.mxu0 0.0
  %v1531 = vand.u32 %v824, 4294901760
  %1532 = vmatpush1.msra.mxu0 %v1531
  %1533 = vmatprep.subr.mxu0 0.0
  %v1534 = vand.u32 %v823, 4294901760
  %1535 = vmatpush1.msra.mxu0 %v1534
  %1536 = vmatprep.subr.mxu0 0.0
  %v1537 = vand.u32 %v822, 4294901760
  %1538 = vmatpush1.msra.mxu0 %v1537
  %1539 = vmatprep.subr.mxu0 0.0
  %v1540 = vand.u32 %v821, 4294901760
  %1541 = vmatpush1.msra.mxu0 %v1540
  %1542 = vmatprep.subr.mxu0 0.0
  %v1543 = vand.u32 %v820, 4294901760
  %1544 = vmatpush1.msra.mxu0 %v1543
  %1545 = vmatprep.subr.mxu0 0.0
  %v1546 = vand.u32 %v819, 4294901760
  %1547 = vmatpush1.msra.mxu0 %v1546
  %1548 = vmatprep.subr.mxu0 0.0
  %1549 = vmatpush2.msra.mxu0 0.0
  %1550 = vmatprep.subr.mxu0 0.0
  %1551 = vmatpush2.msra.mxu0 0.0
  %1552 = vmatprep.subr.mxu0 0.0
  %1553 = vmatpush2.msra.mxu0 0.0
  %1554 = vmatprep.subr.mxu0 0.0
  %1555 = vmatpush2.msra.mxu0 0.0
  %1556 = vmatprep.subr.mxu0 0.0
  %1557 = vmatpush2.msra.mxu0 0.0
  %1558 = vmatprep.subr.mxu0 0.0
  %1559 = vmatpush2.msra.mxu0 0.0
  %1560 = vmatprep.subr.mxu0 0.0
  %1561 = vmatpush2.msra.mxu0 0.0
  %1562 = vmatprep.subr.mxu0 0.0
  %1563 = vmatpush2.msra.mxu0 0.0
  %1564 = vmatprep.subr.mxu0 0.0
  %1565 = vmatpush2.msra.mxu0 0.0
  %1566 = vmatprep.subr.mxu0 0.0
  %1567 = vmatpush2.msra.mxu0 0.0
  %1568 = vmatprep.subr.mxu0 0.0
  %1569 = vmatpush2.msra.mxu0 0.0
  %1570 = vmatprep.subr.mxu0 0.0
  %1571 = vmatpush2.msra.mxu0 0.0
  %1572 = vmatprep.subr.mxu0 0.0
  %1573 = vmatpush2.msra.mxu0 0.0
  %1574 = vmatprep.subr.mxu0 0.0
  %1575 = vmatpush2.msra.mxu0 0.0
  %1576 = vmatprep.subr.mxu0 0.0
  %1577 = vmatpush2.msra.mxu0 0.0
  %1578 = vmatprep.subr.mxu0 0.0
  %1579 = vmatpush2.msra.mxu0 0.0
  %1580 = vmatprep.mubr.f32.mxu0 0.0
  %v1581 = vand.u32 %v815, 4294901760
  %1582 = vmatmul.mubr.f32.gmra.mxu0 %v1581
  %v1583 = vpop.f32.mrf.mxu0
  %v1584 = vadd.f32 %v1479, %v1583
  %v1585 = vpop.f32.mrf.mxu0
  %1586 = vmatprep.mubr.f32.mxu0 0.0
  %v1587 = vand.u32 %v816, 4294901760
  %1588 = vmatmul.mubr.f32.gmra.mxu0 %v1587
  %v1589 = vpop.f32.mrf.mxu0
  %v1590 = vadd.f32 %v1485, %v1589
  %v1591 = vpop.f32.mrf.mxu0
  %1592 = vmatprep.mubr.f32.mxu0 0.0
  %v1593 = vand.u32 %v817, 4294901760
  %1594 = vmatmul.mubr.f32.gmra.mxu0 %v1593
  %v1595 = vpop.f32.mrf.mxu0
  %v1596 = vadd.f32 %v1491, %v1595
  %v1597 = vpop.f32.mrf.mxu0
  %1598 = vmatprep.mubr.f32.mxu0 0.0
  %v1599 = vand.u32 %v818, 4294901760
  %1600 = vmatmul.mubr.f32.gmra.mxu0 %v1599
  %v1601 = vpop.f32.mrf.mxu0
  %v1602 = vadd.f32 %v1497, %v1601
  %v1603 = vpop.f32.mrf.mxu0
  %1604 = vdwg.mxu0
  %v1605 = vmul.f32 %v794, %v794
  %v1606 = vmul.f32 %v800, %v800
  %v1607 = vmul.f32 %v806, %v806
  %v1608 = vmul.f32 %v812, %v812
  %v1609 = vld [vmem:[%s4] sm:$0xff]
  %v1610 = vld [vmem:[%s4 + $0x8] sm:$0xff]
  %v1611 = vld [vmem:[%s4 + $0x10] sm:$0xff]
  %v1612 = vld [vmem:[%s4 + $0x18] sm:$0xff]
  %v1613 = vld [vmem:[%s4 + $0x20] sm:$0xf]
  %vm1614 = vcmask 293888
  %v1616 = vsel %vm1614, %v1605, 0
  %v1619 = vsel %vm1614, %v1606, 0
  %v1622 = vsel %vm1614, %v1607, 0
  %v1625 = vsel %vm1614, %v1608, 0
  %vm1627 = vcmask 1043456
  %v1629 = vsel %vm1627, %v1613, 0
  %1631 = vmatprep.subr.mxu0 0.0
  %1632 = vmatpush1.msra.mxu0 0.0
  %1633 = vmatprep.subr.mxu0 0.0
  %1634 = vmatpush1.msra.mxu0 0.0
  %1635 = vmatprep.subr.mxu0 0.0
  %1636 = vmatpush1.msra.mxu0 0.0
  %1637 = vmatprep.subr.mxu0 0.0
  %1638 = vmatpush1.msra.mxu0 0.0
  %1639 = vmatprep.subr.mxu0 0.0
  %1640 = vmatpush1.msra.mxu0 0.0
  %1641 = vmatprep.subr.mxu0 0.0
  %1642 = vmatpush1.msra.mxu0 0.0
  %1643 = vmatprep.subr.mxu0 0.0
  %1644 = vmatpush1.msra.mxu0 0.0
  %1645 = vmatprep.subr.mxu0 0.0
  %1646 = vmatpush1.msra.mxu0 0.0
  %1647 = vmatprep.subr.mxu0 0.0
  %1648 = vmatpush1.msra.mxu0 0.0
  %1649 = vmatprep.subr.mxu0 0.0
  %1650 = vmatpush1.msra.mxu0 0.0
  %1651 = vmatprep.subr.mxu0 0.0
  %1652 = vmatpush1.msra.mxu0 0.0
  %1653 = vmatprep.subr.mxu0 0.0
  %v1654 = vand.u32 %v1629, 4294901760
  %1655 = vmatpush1.msra.mxu0 %v1654
  %1656 = vmatprep.subr.mxu0 0.0
  %v1657 = vand.u32 %v1612, 4294901760
  %1658 = vmatpush1.msra.mxu0 %v1657
  %1659 = vmatprep.subr.mxu0 0.0
  %v1660 = vand.u32 %v1611, 4294901760
  %1661 = vmatpush1.msra.mxu0 %v1660
  %1662 = vmatprep.subr.mxu0 0.0
  %v1663 = vand.u32 %v1610, 4294901760
  %1664 = vmatpush1.msra.mxu0 %v1663
  %1665 = vmatprep.subr.mxu0 0.0
  %v1666 = vand.u32 %v1609, 4294901760
  %1667 = vmatpush1.msra.mxu0 %v1666
  %1668 = vmatprep.subr.mxu0 0.0
  %1669 = vmatpush2.msra.mxu0 0.0
  %1670 = vmatprep.subr.mxu0 0.0
  %1671 = vmatpush2.msra.mxu0 0.0
  %1672 = vmatprep.subr.mxu0 0.0
  %1673 = vmatpush2.msra.mxu0 0.0
  %1674 = vmatprep.subr.mxu0 0.0
  %1675 = vmatpush2.msra.mxu0 0.0
  %1676 = vmatprep.subr.mxu0 0.0
  %1677 = vmatpush2.msra.mxu0 0.0
  %1678 = vmatprep.subr.mxu0 0.0
  %1679 = vmatpush2.msra.mxu0 0.0
  %1680 = vmatprep.subr.mxu0 0.0
  %1681 = vmatpush2.msra.mxu0 0.0
  %1682 = vmatprep.subr.mxu0 0.0
  %1683 = vmatpush2.msra.mxu0 0.0
  %1684 = vmatprep.subr.mxu0 0.0
  %1685 = vmatpush2.msra.mxu0 0.0
  %1686 = vmatprep.subr.mxu0 0.0
  %1687 = vmatpush2.msra.mxu0 0.0
  %1688 = vmatprep.subr.mxu0 0.0
  %1689 = vmatpush2.msra.mxu0 0.0
  %1690 = vmatprep.subr.mxu0 0.0
  %1691 = vmatpush2.msra.mxu0 0.0
  %1692 = vmatprep.subr.mxu0 0.0
  %1693 = vmatpush2.msra.mxu0 0.0
  %1694 = vmatprep.subr.mxu0 0.0
  %1695 = vmatpush2.msra.mxu0 0.0
  %1696 = vmatprep.subr.mxu0 0.0
  %1697 = vmatpush2.msra.mxu0 0.0
  %1698 = vmatprep.subr.mxu0 0.0
  %1699 = vmatpush2.msra.mxu0 0.0
  %1700 = vmatprep.mubr.f32.mxu0 0.0
  %v1701 = vand.u32 %v1616, 4294901760
  %v1702 = vsub.f32 %v1616, %v1701
  %v1703 = vand.u32 %v1702, 4294901760
  %v1704 = vsub.f32 %v1702, %v1703
  %v1705 = vand.u32 %v1704, 4294901760
  %1706 = vmatmul.mubr.f32.gmra.mxu0 %v1705
  %v1707 = vpop.f32.mrf.mxu0
  %v1708 = vadd.f32 0.0, %v1707
  %v1709 = vpop.f32.mrf.mxu0
  %1710 = vmatprep.mubr.f32.mxu0 0.0
  %v1711 = vand.u32 %v1619, 4294901760
  %v1712 = vsub.f32 %v1619, %v1711
  %v1713 = vand.u32 %v1712, 4294901760
  %v1714 = vsub.f32 %v1712, %v1713
  %v1715 = vand.u32 %v1714, 4294901760
  %1716 = vmatmul.mubr.f32.gmra.mxu0 %v1715
  %v1717 = vpop.f32.mrf.mxu0
  %v1718 = vadd.f32 0.0, %v1717
  %v1719 = vpop.f32.mrf.mxu0
  %1720 = vmatprep.mubr.f32.mxu0 0.0
  %v1721 = vand.u32 %v1622, 4294901760
  %v1722 = vsub.f32 %v1622, %v1721
  %v1723 = vand.u32 %v1722, 4294901760
  %v1724 = vsub.f32 %v1722, %v1723
  %v1725 = vand.u32 %v1724, 4294901760
  %1726 = vmatmul.mubr.f32.gmra.mxu0 %v1725
  %v1727 = vpop.f32.mrf.mxu0
  %v1728 = vadd.f32 0.0, %v1727
  %v1729 = vpop.f32.mrf.mxu0
  %1730 = vmatprep.mubr.f32.mxu0 0.0
  %v1731 = vand.u32 %v1625, 4294901760
  %v1732 = vsub.f32 %v1625, %v1731
  %v1733 = vand.u32 %v1732, 4294901760
  %v1734 = vsub.f32 %v1732, %v1733
  %v1735 = vand.u32 %v1734, 4294901760
  %1736 = vmatmul.mubr.f32.gmra.mxu0 %v1735
  %v1737 = vpop.f32.mrf.mxu0
  %v1738 = vadd.f32 0.0, %v1737
  %v1739 = vpop.f32.mrf.mxu0
  %1740 = vdwg.mxu0
  %1741 = vmatprep.subr.mxu0 0.0
  %1742 = vmatpush1.msra.mxu0 0.0
  %1743 = vmatprep.subr.mxu0 0.0
  %1744 = vmatpush1.msra.mxu0 0.0
  %1745 = vmatprep.subr.mxu0 0.0
  %1746 = vmatpush1.msra.mxu0 0.0
  %1747 = vmatprep.subr.mxu0 0.0
  %1748 = vmatpush1.msra.mxu0 0.0
  %1749 = vmatprep.subr.mxu0 0.0
  %1750 = vmatpush1.msra.mxu0 0.0
  %1751 = vmatprep.subr.mxu0 0.0
  %1752 = vmatpush1.msra.mxu0 0.0
  %1753 = vmatprep.subr.mxu0 0.0
  %1754 = vmatpush1.msra.mxu0 0.0
  %1755 = vmatprep.subr.mxu0 0.0
  %1756 = vmatpush1.msra.mxu0 0.0
  %1757 = vmatprep.subr.mxu0 0.0
  %1758 = vmatpush1.msra.mxu0 0.0
  %1759 = vmatprep.subr.mxu0 0.0
  %1760 = vmatpush1.msra.mxu0 0.0
  %1761 = vmatprep.subr.mxu0 0.0
  %1762 = vmatpush1.msra.mxu0 0.0
  %1763 = vmatprep.subr.mxu0 0.0
  %v1764 = vand.u32 %v1629, 4294901760
  %v1765 = vsub.f32 %v1629, %v1764
  %v1766 = vand.u32 %v1765, 4294901760
  %v1767 = vsub.f32 %v1765, %v1766
  %v1768 = vand.u32 %v1767, 4294901760
  %1769 = vmatpush1.msra.mxu0 %v1768
  %1770 = vmatprep.subr.mxu0 0.0
  %v1771 = vand.u32 %v1612, 4294901760
  %v1772 = vsub.f32 %v1612, %v1771
  %v1773 = vand.u32 %v1772, 4294901760
  %v1774 = vsub.f32 %v1772, %v1773
  %v1775 = vand.u32 %v1774, 4294901760
  %1776 = vmatpush1.msra.mxu0 %v1775
  %1777 = vmatprep.subr.mxu0 0.0
  %v1778 = vand.u32 %v1611, 4294901760
  %v1779 = vsub.f32 %v1611, %v1778
  %v1780 = vand.u32 %v1779, 4294901760
  %v1781 = vsub.f32 %v1779, %v1780
  %v1782 = vand.u32 %v1781, 4294901760
  %1783 = vmatpush1.msra.mxu0 %v1782
  %1784 = vmatprep.subr.mxu0 0.0
  %v1785 = vand.u32 %v1610, 4294901760
  %v1786 = vsub.f32 %v1610, %v1785
  %v1787 = vand.u32 %v1786, 4294901760
  %v1788 = vsub.f32 %v1786, %v1787
  %v1789 = vand.u32 %v1788, 4294901760
  %1790 = vmatpush1.msra.mxu0 %v1789
  %1791 = vmatprep.subr.mxu0 0.0
  %v1792 = vand.u32 %v1609, 4294901760
  %v1793 = vsub.f32 %v1609, %v1792
  %v1794 = vand.u32 %v1793, 4294901760
  %v1795 = vsub.f32 %v1793, %v1794
  %v1796 = vand.u32 %v1795, 4294901760
  %1797 = vmatpush1.msra.mxu0 %v1796
  %1798 = vmatprep.subr.mxu0 0.0
  %1799 = vmatpush2.msra.mxu0 0.0
  %1800 = vmatprep.subr.mxu0 0.0
  %1801 = vmatpush2.msra.mxu0 0.0
  %1802 = vmatprep.subr.mxu0 0.0
  %1803 = vmatpush2.msra.mxu0 0.0
  %1804 = vmatprep.subr.mxu0 0.0
  %1805 = vmatpush2.msra.mxu0 0.0
  %1806 = vmatprep.subr.mxu0 0.0
  %1807 = vmatpush2.msra.mxu0 0.0
  %1808 = vmatprep.subr.mxu0 0.0
  %1809 = vmatpush2.msra.mxu0 0.0
  %1810 = vmatprep.subr.mxu0 0.0
  %1811 = vmatpush2.msra.mxu0 0.0
  %1812 = vmatprep.subr.mxu0 0.0
  %1813 = vmatpush2.msra.mxu0 0.0
  %1814 = vmatprep.subr.mxu0 0.0
  %1815 = vmatpush2.msra.mxu0 0.0
  %1816 = vmatprep.subr.mxu0 0.0
  %1817 = vmatpush2.msra.mxu0 0.0
  %1818 = vmatprep.subr.mxu0 0.0
  %1819 = vmatpush2.msra.mxu0 0.0
  %1820 = vmatprep.subr.mxu0 0.0
  %1821 = vmatpush2.msra.mxu0 0.0
  %1822 = vmatprep.subr.mxu0 0.0
  %1823 = vmatpush2.msra.mxu0 0.0
  %1824 = vmatprep.subr.mxu0 0.0
  %1825 = vmatpush2.msra.mxu0 0.0
  %1826 = vmatprep.subr.mxu0 0.0
  %1827 = vmatpush2.msra.mxu0 0.0
  %1828 = vmatprep.subr.mxu0 0.0
  %1829 = vmatpush2.msra.mxu0 0.0
  %1830 = vmatprep.mubr.f32.mxu0 0.0
  %v1831 = vand.u32 %v1616, 4294901760
  %1832 = vmatmul.mubr.f32.gmra.mxu0 %v1831
  %v1833 = vpop.f32.mrf.mxu0
  %v1834 = vadd.f32 %v1708, %v1833
  %v1835 = vpop.f32.mrf.mxu0
  %1836 = vmatprep.mubr.f32.mxu0 0.0
  %v1837 = vand.u32 %v1619, 4294901760
  %1838 = vmatmul.mubr.f32.gmra.mxu0 %v1837
  %v1839 = vpop.f32.mrf.mxu0
  %v1840 = vadd.f32 %v1718, %v1839
  %v1841 = vpop.f32.mrf.mxu0
  %1842 = vmatprep.mubr.f32.mxu0 0.0
  %v1843 = vand.u32 %v1622, 4294901760
  %1844 = vmatmul.mubr.f32.gmra.mxu0 %v1843
  %v1845 = vpop.f32.mrf.mxu0
  %v1846 = vadd.f32 %v1728, %v1845
  %v1847 = vpop.f32.mrf.mxu0
  %1848 = vmatprep.mubr.f32.mxu0 0.0
  %v1849 = vand.u32 %v1625, 4294901760
  %1850 = vmatmul.mubr.f32.gmra.mxu0 %v1849
  %v1851 = vpop.f32.mrf.mxu0
  %v1852 = vadd.f32 %v1738, %v1851
  %v1853 = vpop.f32.mrf.mxu0
  %1854 = vdwg.mxu0
  %1855 = vmatprep.subr.mxu0 0.0
  %1856 = vmatpush1.msra.mxu0 0.0
  %1857 = vmatprep.subr.mxu0 0.0
  %1858 = vmatpush1.msra.mxu0 0.0
  %1859 = vmatprep.subr.mxu0 0.0
  %1860 = vmatpush1.msra.mxu0 0.0
  %1861 = vmatprep.subr.mxu0 0.0
  %1862 = vmatpush1.msra.mxu0 0.0
  %1863 = vmatprep.subr.mxu0 0.0
  %1864 = vmatpush1.msra.mxu0 0.0
  %1865 = vmatprep.subr.mxu0 0.0
  %1866 = vmatpush1.msra.mxu0 0.0
  %1867 = vmatprep.subr.mxu0 0.0
  %1868 = vmatpush1.msra.mxu0 0.0
  %1869 = vmatprep.subr.mxu0 0.0
  %1870 = vmatpush1.msra.mxu0 0.0
  %1871 = vmatprep.subr.mxu0 0.0
  %1872 = vmatpush1.msra.mxu0 0.0
  %1873 = vmatprep.subr.mxu0 0.0
  %1874 = vmatpush1.msra.mxu0 0.0
  %1875 = vmatprep.subr.mxu0 0.0
  %1876 = vmatpush1.msra.mxu0 0.0
  %1877 = vmatprep.subr.mxu0 0.0
  %v1878 = vand.u32 %v1629, 4294901760
  %v1879 = vsub.f32 %v1629, %v1878
  %1880 = vmatpush1.msra.mxu0 %v1879
  %1881 = vmatprep.subr.mxu0 0.0
  %v1882 = vand.u32 %v1612, 4294901760
  %v1883 = vsub.f32 %v1612, %v1882
  %1884 = vmatpush1.msra.mxu0 %v1883
  %1885 = vmatprep.subr.mxu0 0.0
  %v1886 = vand.u32 %v1611, 4294901760
  %v1887 = vsub.f32 %v1611, %v1886
  %1888 = vmatpush1.msra.mxu0 %v1887
  %1889 = vmatprep.subr.mxu0 0.0
  %v1890 = vand.u32 %v1610, 4294901760
  %v1891 = vsub.f32 %v1610, %v1890
  %1892 = vmatpush1.msra.mxu0 %v1891
  %1893 = vmatprep.subr.mxu0 0.0
  %v1894 = vand.u32 %v1609, 4294901760
  %v1895 = vsub.f32 %v1609, %v1894
  %1896 = vmatpush1.msra.mxu0 %v1895
  %1897 = vmatprep.subr.mxu0 0.0
  %1898 = vmatpush2.msra.mxu0 0.0
  %1899 = vmatprep.subr.mxu0 0.0
  %1900 = vmatpush2.msra.mxu0 0.0
  %1901 = vmatprep.subr.mxu0 0.0
  %1902 = vmatpush2.msra.mxu0 0.0
  %1903 = vmatprep.subr.mxu0 0.0
  %1904 = vmatpush2.msra.mxu0 0.0
  %1905 = vmatprep.subr.mxu0 0.0
  %1906 = vmatpush2.msra.mxu0 0.0
  %1907 = vmatprep.subr.mxu0 0.0
  %1908 = vmatpush2.msra.mxu0 0.0
  %1909 = vmatprep.subr.mxu0 0.0
  %1910 = vmatpush2.msra.mxu0 0.0
  %1911 = vmatprep.subr.mxu0 0.0
  %1912 = vmatpush2.msra.mxu0 0.0
  %1913 = vmatprep.subr.mxu0 0.0
  %1914 = vmatpush2.msra.mxu0 0.0
  %1915 = vmatprep.subr.mxu0 0.0
  %1916 = vmatpush2.msra.mxu0 0.0
  %1917 = vmatprep.subr.mxu0 0.0
  %1918 = vmatpush2.msra.mxu0 0.0
  %1919 = vmatprep.subr.mxu0 0.0
  %1920 = vmatpush2.msra.mxu0 0.0
  %1921 = vmatprep.subr.mxu0 0.0
  %1922 = vmatpush2.msra.mxu0 0.0
  %1923 = vmatprep.subr.mxu0 0.0
  %1924 = vmatpush2.msra.mxu0 0.0
  %1925 = vmatprep.subr.mxu0 0.0
  %1926 = vmatpush2.msra.mxu0 0.0
  %1927 = vmatprep.subr.mxu0 0.0
  %1928 = vmatpush2.msra.mxu0 0.0
  %1929 = vmatprep.mubr.f32.mxu0 0.0
  %v1930 = vand.u32 %v1616, 4294901760
  %v1931 = vsub.f32 %v1616, %v1930
  %1932 = vmatmul.mubr.f32.gmra.mxu0 %v1931
  %v1933 = vpop.f32.mrf.mxu0
  %v1934 = vadd.f32 %v1834, %v1933
  %v1935 = vpop.f32.mrf.mxu0
  %1936 = vmatprep.mubr.f32.mxu0 0.0
  %v1937 = vand.u32 %v1619, 4294901760
  %v1938 = vsub.f32 %v1619, %v1937
  %1939 = vmatmul.mubr.f32.gmra.mxu0 %v1938
  %v1940 = vpop.f32.mrf.mxu0
  %v1941 = vadd.f32 %v1840, %v1940
  %v1942 = vpop.f32.mrf.mxu0
  %1943 = vmatprep.mubr.f32.mxu0 0.0
  %v1944 = vand.u32 %v1622, 4294901760
  %v1945 = vsub.f32 %v1622, %v1944
  %1946 = vmatmul.mubr.f32.gmra.mxu0 %v1945
  %v1947 = vpop.f32.mrf.mxu0
  %v1948 = vadd.f32 %v1846, %v1947
  %v1949 = vpop.f32.mrf.mxu0
  %1950 = vmatprep.mubr.f32.mxu0 0.0
  %v1951 = vand.u32 %v1625, 4294901760
  %v1952 = vsub.f32 %v1625, %v1951
  %1953 = vmatmul.mubr.f32.gmra.mxu0 %v1952
  %v1954 = vpop.f32.mrf.mxu0
  %v1955 = vadd.f32 %v1852, %v1954
  %v1956 = vpop.f32.mrf.mxu0
  %1957 = vdwg.mxu0
  %1958 = vmatprep.subr.mxu0 0.0
  %1959 = vmatpush1.msra.mxu0 0.0
  %1960 = vmatprep.subr.mxu0 0.0
  %1961 = vmatpush1.msra.mxu0 0.0
  %1962 = vmatprep.subr.mxu0 0.0
  %1963 = vmatpush1.msra.mxu0 0.0
  %1964 = vmatprep.subr.mxu0 0.0
  %1965 = vmatpush1.msra.mxu0 0.0
  %1966 = vmatprep.subr.mxu0 0.0
  %1967 = vmatpush1.msra.mxu0 0.0
  %1968 = vmatprep.subr.mxu0 0.0
  %1969 = vmatpush1.msra.mxu0 0.0
  %1970 = vmatprep.subr.mxu0 0.0
  %1971 = vmatpush1.msra.mxu0 0.0
  %1972 = vmatprep.subr.mxu0 0.0
  %1973 = vmatpush1.msra.mxu0 0.0
  %1974 = vmatprep.subr.mxu0 0.0
  %1975 = vmatpush1.msra.mxu0 0.0
  %1976 = vmatprep.subr.mxu0 0.0
  %1977 = vmatpush1.msra.mxu0 0.0
  %1978 = vmatprep.subr.mxu0 0.0
  %1979 = vmatpush1.msra.mxu0 0.0
  %1980 = vmatprep.subr.mxu0 0.0
  %v1981 = vand.u32 %v1629, 4294901760
  %1982 = vmatpush1.msra.mxu0 %v1981
  %1983 = vmatprep.subr.mxu0 0.0
  %v1984 = vand.u32 %v1612, 4294901760
  %1985 = vmatpush1.msra.mxu0 %v1984
  %1986 = vmatprep.subr.mxu0 0.0
  %v1987 = vand.u32 %v1611, 4294901760
  %1988 = vmatpush1.msra.mxu0 %v1987
  %1989 = vmatprep.subr.mxu0 0.0
  %v1990 = vand.u32 %v1610, 4294901760
  %1991 = vmatpush1.msra.mxu0 %v1990
  %1992 = vmatprep.subr.mxu0 0.0
  %v1993 = vand.u32 %v1609, 4294901760
  %1994 = vmatpush1.msra.mxu0 %v1993
  %1995 = vmatprep.subr.mxu0 0.0
  %1996 = vmatpush2.msra.mxu0 0.0
  %1997 = vmatprep.subr.mxu0 0.0
  %1998 = vmatpush2.msra.mxu0 0.0
  %1999 = vmatprep.subr.mxu0 0.0
  %2000 = vmatpush2.msra.mxu0 0.0
  %2001 = vmatprep.subr.mxu0 0.0
  %2002 = vmatpush2.msra.mxu0 0.0
  %2003 = vmatprep.subr.mxu0 0.0
  %2004 = vmatpush2.msra.mxu0 0.0
  %2005 = vmatprep.subr.mxu0 0.0
  %2006 = vmatpush2.msra.mxu0 0.0
  %2007 = vmatprep.subr.mxu0 0.0
  %2008 = vmatpush2.msra.mxu0 0.0
  %2009 = vmatprep.subr.mxu0 0.0
  %2010 = vmatpush2.msra.mxu0 0.0
  %2011 = vmatprep.subr.mxu0 0.0
  %2012 = vmatpush2.msra.mxu0 0.0
  %2013 = vmatprep.subr.mxu0 0.0
  %2014 = vmatpush2.msra.mxu0 0.0
  %2015 = vmatprep.subr.mxu0 0.0
  %2016 = vmatpush2.msra.mxu0 0.0
  %2017 = vmatprep.subr.mxu0 0.0
  %2018 = vmatpush2.msra.mxu0 0.0
  %2019 = vmatprep.subr.mxu0 0.0
  %2020 = vmatpush2.msra.mxu0 0.0
  %2021 = vmatprep.subr.mxu0 0.0
  %2022 = vmatpush2.msra.mxu0 0.0
  %2023 = vmatprep.subr.mxu0 0.0
  %2024 = vmatpush2.msra.mxu0 0.0
  %2025 = vmatprep.subr.mxu0 0.0
  %2026 = vmatpush2.msra.mxu0 0.0
  %2027 = vmatprep.mubr.f32.mxu0 0.0
  %v2028 = vand.u32 %v1616, 4294901760
  %v2029 = vsub.f32 %v1616, %v2028
  %v2030 = vand.u32 %v2029, 4294901760
  %2031 = vmatmul.mubr.f32.gmra.mxu0 %v2030
  %v2032 = vpop.f32.mrf.mxu0
  %v2033 = vadd.f32 %v1934, %v2032
  %v2034 = vpop.f32.mrf.mxu0
  %2035 = vmatprep.mubr.f32.mxu0 0.0
  %v2036 = vand.u32 %v1619, 4294901760
  %v2037 = vsub.f32 %v1619, %v2036
  %v2038 = vand.u32 %v2037, 4294901760
  %2039 = vmatmul.mubr.f32.gmra.mxu0 %v2038
  %v2040 = vpop.f32.mrf.mxu0
  %v2041 = vadd.f32 %v1941, %v2040
  %v2042 = vpop.f32.mrf.mxu0
  %2043 = vmatprep.mubr.f32.mxu0 0.0
  %v2044 = vand.u32 %v1622, 4294901760
  %v2045 = vsub.f32 %v1622, %v2044
  %v2046 = vand.u32 %v2045, 4294901760
  %2047 = vmatmul.mubr.f32.gmra.mxu0 %v2046
  %v2048 = vpop.f32.mrf.mxu0
  %v2049 = vadd.f32 %v1948, %v2048
  %v2050 = vpop.f32.mrf.mxu0
  %2051 = vmatprep.mubr.f32.mxu0 0.0
  %v2052 = vand.u32 %v1625, 4294901760
  %v2053 = vsub.f32 %v1625, %v2052
  %v2054 = vand.u32 %v2053, 4294901760
  %2055 = vmatmul.mubr.f32.gmra.mxu0 %v2054
  %v2056 = vpop.f32.mrf.mxu0
  %v2057 = vadd.f32 %v1955, %v2056
  %v2058 = vpop.f32.mrf.mxu0
  %2059 = vdwg.mxu0
  %2060 = vmatprep.subr.mxu0 0.0
  %2061 = vmatpush1.msra.mxu0 0.0
  %2062 = vmatprep.subr.mxu0 0.0
  %2063 = vmatpush1.msra.mxu0 0.0
  %2064 = vmatprep.subr.mxu0 0.0
  %2065 = vmatpush1.msra.mxu0 0.0
  %2066 = vmatprep.subr.mxu0 0.0
  %2067 = vmatpush1.msra.mxu0 0.0
  %2068 = vmatprep.subr.mxu0 0.0
  %2069 = vmatpush1.msra.mxu0 0.0
  %2070 = vmatprep.subr.mxu0 0.0
  %2071 = vmatpush1.msra.mxu0 0.0
  %2072 = vmatprep.subr.mxu0 0.0
  %2073 = vmatpush1.msra.mxu0 0.0
  %2074 = vmatprep.subr.mxu0 0.0
  %2075 = vmatpush1.msra.mxu0 0.0
  %2076 = vmatprep.subr.mxu0 0.0
  %2077 = vmatpush1.msra.mxu0 0.0
  %2078 = vmatprep.subr.mxu0 0.0
  %2079 = vmatpush1.msra.mxu0 0.0
  %2080 = vmatprep.subr.mxu0 0.0
  %2081 = vmatpush1.msra.mxu0 0.0
  %2082 = vmatprep.subr.mxu0 0.0
  %v2083 = vand.u32 %v1629, 4294901760
  %v2084 = vsub.f32 %v1629, %v2083
  %v2085 = vand.u32 %v2084, 4294901760
  %2086 = vmatpush1.msra.mxu0 %v2085
  %2087 = vmatprep.subr.mxu0 0.0
  %v2088 = vand.u32 %v1612, 4294901760
  %v2089 = vsub.f32 %v1612, %v2088
  %v2090 = vand.u32 %v2089, 4294901760
  %2091 = vmatpush1.msra.mxu0 %v2090
  %2092 = vmatprep.subr.mxu0 0.0
  %v2093 = vand.u32 %v1611, 4294901760
  %v2094 = vsub.f32 %v1611, %v2093
  %v2095 = vand.u32 %v2094, 4294901760
  %2096 = vmatpush1.msra.mxu0 %v2095
  %2097 = vmatprep.subr.mxu0 0.0
  %v2098 = vand.u32 %v1610, 4294901760
  %v2099 = vsub.f32 %v1610, %v2098
  %v2100 = vand.u32 %v2099, 4294901760
  %2101 = vmatpush1.msra.mxu0 %v2100
  %2102 = vmatprep.subr.mxu0 0.0
  %v2103 = vand.u32 %v1609, 4294901760
  %v2104 = vsub.f32 %v1609, %v2103
  %v2105 = vand.u32 %v2104, 4294901760
  %2106 = vmatpush1.msra.mxu0 %v2105
  %2107 = vmatprep.subr.mxu0 0.0
  %2108 = vmatpush2.msra.mxu0 0.0
  %2109 = vmatprep.subr.mxu0 0.0
  %2110 = vmatpush2.msra.mxu0 0.0
  %2111 = vmatprep.subr.mxu0 0.0
  %2112 = vmatpush2.msra.mxu0 0.0
  %2113 = vmatprep.subr.mxu0 0.0
  %2114 = vmatpush2.msra.mxu0 0.0
  %2115 = vmatprep.subr.mxu0 0.0
  %2116 = vmatpush2.msra.mxu0 0.0
  %2117 = vmatprep.subr.mxu0 0.0
  %2118 = vmatpush2.msra.mxu0 0.0
  %2119 = vmatprep.subr.mxu0 0.0
  %2120 = vmatpush2.msra.mxu0 0.0
  %2121 = vmatprep.subr.mxu0 0.0
  %2122 = vmatpush2.msra.mxu0 0.0
  %2123 = vmatprep.subr.mxu0 0.0
  %2124 = vmatpush2.msra.mxu0 0.0
  %2125 = vmatprep.subr.mxu0 0.0
  %2126 = vmatpush2.msra.mxu0 0.0
  %2127 = vmatprep.subr.mxu0 0.0
  %2128 = vmatpush2.msra.mxu0 0.0
  %2129 = vmatprep.subr.mxu0 0.0
  %2130 = vmatpush2.msra.mxu0 0.0
  %2131 = vmatprep.subr.mxu0 0.0
  %2132 = vmatpush2.msra.mxu0 0.0
  %2133 = vmatprep.subr.mxu0 0.0
  %2134 = vmatpush2.msra.mxu0 0.0
  %2135 = vmatprep.subr.mxu0 0.0
  %2136 = vmatpush2.msra.mxu0 0.0
  %2137 = vmatprep.subr.mxu0 0.0
  %2138 = vmatpush2.msra.mxu0 0.0
  %2139 = vmatprep.mubr.f32.mxu0 0.0
  %v2140 = vand.u32 %v1616, 4294901760
  %2141 = vmatmul.mubr.f32.gmra.mxu0 %v2140
  %v2142 = vpop.f32.mrf.mxu0
  %v2143 = vadd.f32 %v2033, %v2142
  %v2144 = vpop.f32.mrf.mxu0
  %2145 = vmatprep.mubr.f32.mxu0 0.0
  %v2146 = vand.u32 %v1619, 4294901760
  %2147 = vmatmul.mubr.f32.gmra.mxu0 %v2146
  %v2148 = vpop.f32.mrf.mxu0
  %v2149 = vadd.f32 %v2041, %v2148
  %v2150 = vpop.f32.mrf.mxu0
  %2151 = vmatprep.mubr.f32.mxu0 0.0
  %v2152 = vand.u32 %v1622, 4294901760
  %2153 = vmatmul.mubr.f32.gmra.mxu0 %v2152
  %v2154 = vpop.f32.mrf.mxu0
  %v2155 = vadd.f32 %v2049, %v2154
  %v2156 = vpop.f32.mrf.mxu0
  %2157 = vmatprep.mubr.f32.mxu0 0.0
  %v2158 = vand.u32 %v1625, 4294901760
  %2159 = vmatmul.mubr.f32.gmra.mxu0 %v2158
  %v2160 = vpop.f32.mrf.mxu0
  %v2161 = vadd.f32 %v2057, %v2160
  %v2162 = vpop.f32.mrf.mxu0
  %2163 = vdwg.mxu0
  %2164 = vmatprep.subr.mxu0 0.0
  %2165 = vmatpush1.msra.mxu0 0.0
  %2166 = vmatprep.subr.mxu0 0.0
  %2167 = vmatpush1.msra.mxu0 0.0
  %2168 = vmatprep.subr.mxu0 0.0
  %2169 = vmatpush1.msra.mxu0 0.0
  %2170 = vmatprep.subr.mxu0 0.0
  %2171 = vmatpush1.msra.mxu0 0.0
  %2172 = vmatprep.subr.mxu0 0.0
  %2173 = vmatpush1.msra.mxu0 0.0
  %2174 = vmatprep.subr.mxu0 0.0
  %2175 = vmatpush1.msra.mxu0 0.0
  %2176 = vmatprep.subr.mxu0 0.0
  %2177 = vmatpush1.msra.mxu0 0.0
  %2178 = vmatprep.subr.mxu0 0.0
  %2179 = vmatpush1.msra.mxu0 0.0
  %2180 = vmatprep.subr.mxu0 0.0
  %2181 = vmatpush1.msra.mxu0 0.0
  %2182 = vmatprep.subr.mxu0 0.0
  %2183 = vmatpush1.msra.mxu0 0.0
  %2184 = vmatprep.subr.mxu0 0.0
  %2185 = vmatpush1.msra.mxu0 0.0
  %2186 = vmatprep.subr.mxu0 0.0
  %v2187 = vand.u32 %v1629, 4294901760
  %2188 = vmatpush1.msra.mxu0 %v2187
  %2189 = vmatprep.subr.mxu0 0.0
  %v2190 = vand.u32 %v1612, 4294901760
  %2191 = vmatpush1.msra.mxu0 %v2190
  %2192 = vmatprep.subr.mxu0 0.0
  %v2193 = vand.u32 %v1611, 4294901760
  %2194 = vmatpush1.msra.mxu0 %v2193
  %2195 = vmatprep.subr.mxu0 0.0
  %v2196 = vand.u32 %v1610, 4294901760
  %2197 = vmatpush1.msra.mxu0 %v2196
  %2198 = vmatprep.subr.mxu0 0.0
  %v2199 = vand.u32 %v1609, 4294901760
  %2200 = vmatpush1.msra.mxu0 %v2199
  %2201 = vmatprep.subr.mxu0 0.0
  %2202 = vmatpush2.msra.mxu0 0.0
  %2203 = vmatprep.subr.mxu0 0.0
  %2204 = vmatpush2.msra.mxu0 0.0
  %2205 = vmatprep.subr.mxu0 0.0
  %2206 = vmatpush2.msra.mxu0 0.0
  %2207 = vmatprep.subr.mxu0 0.0
  %2208 = vmatpush2.msra.mxu0 0.0
  %2209 = vmatprep.subr.mxu0 0.0
  %2210 = vmatpush2.msra.mxu0 0.0
  %2211 = vmatprep.subr.mxu0 0.0
  %2212 = vmatpush2.msra.mxu0 0.0
  %2213 = vmatprep.subr.mxu0 0.0
  %2214 = vmatpush2.msra.mxu0 0.0
  %2215 = vmatprep.subr.mxu0 0.0
  %2216 = vmatpush2.msra.mxu0 0.0
  %2217 = vmatprep.subr.mxu0 0.0
  %2218 = vmatpush2.msra.mxu0 0.0
  %2219 = vmatprep.subr.mxu0 0.0
  %2220 = vmatpush2.msra.mxu0 0.0
  %2221 = vmatprep.subr.mxu0 0.0
  %2222 = vmatpush2.msra.mxu0 0.0
  %2223 = vmatprep.subr.mxu0 0.0
  %2224 = vmatpush2.msra.mxu0 0.0
  %2225 = vmatprep.subr.mxu0 0.0
  %2226 = vmatpush2.msra.mxu0 0.0
  %2227 = vmatprep.subr.mxu0 0.0
  %2228 = vmatpush2.msra.mxu0 0.0
  %2229 = vmatprep.subr.mxu0 0.0
  %2230 = vmatpush2.msra.mxu0 0.0
  %2231 = vmatprep.subr.mxu0 0.0
  %2232 = vmatpush2.msra.mxu0 0.0
  %2233 = vmatprep.mubr.f32.mxu0 0.0
  %v2234 = vand.u32 %v1616, 4294901760
  %2235 = vmatmul.mubr.f32.gmra.mxu0 %v2234
  %v2236 = vpop.f32.mrf.mxu0
  %v2237 = vadd.f32 %v2143, %v2236
  %v2238 = vpop.f32.mrf.mxu0
  %2239 = vmatprep.mubr.f32.mxu0 0.0
  %v2240 = vand.u32 %v1619, 4294901760
  %2241 = vmatmul.mubr.f32.gmra.mxu0 %v2240
  %v2242 = vpop.f32.mrf.mxu0
  %v2243 = vadd.f32 %v2149, %v2242
  %v2244 = vpop.f32.mrf.mxu0
  %2245 = vmatprep.mubr.f32.mxu0 0.0
  %v2246 = vand.u32 %v1622, 4294901760
  %2247 = vmatmul.mubr.f32.gmra.mxu0 %v2246
  %v2248 = vpop.f32.mrf.mxu0
  %v2249 = vadd.f32 %v2155, %v2248
  %v2250 = vpop.f32.mrf.mxu0
  %2251 = vmatprep.mubr.f32.mxu0 0.0
  %v2252 = vand.u32 %v1625, 4294901760
  %2253 = vmatmul.mubr.f32.gmra.mxu0 %v2252
  %v2254 = vpop.f32.mrf.mxu0
  %v2255 = vadd.f32 %v2161, %v2254
  %v2256 = vpop.f32.mrf.mxu0
  %2257 = vdwg.mxu0
  %v2258 = vld [vmem:[%s5] sm:$0xff]
  %v2259 = vld [vmem:[%s5 + $0x8] sm:$0xff]
  %v2260 = vld [vmem:[%s5 + $0x10] sm:$0xff]
  %v2261 = vld [vmem:[%s5 + $0x18] sm:$0xff]
  %v2262 = vld [vmem:[%s5 + $0x20] sm:$0xf]
  %v2264 = vsel %vm1614, %v794, 0
  %v2267 = vsel %vm1614, %v800, 0
  %v2270 = vsel %vm1614, %v806, 0
  %v2273 = vsel %vm1614, %v812, 0
  %v2276 = vsel %vm1627, %v2262, 0
  %2278 = vmatprep.subr.mxu0 0.0
  %2279 = vmatpush1.msra.mxu0 0.0
  %2280 = vmatprep.subr.mxu0 0.0
  %2281 = vmatpush1.msra.mxu0 0.0
  %2282 = vmatprep.subr.mxu0 0.0
  %2283 = vmatpush1.msra.mxu0 0.0
  %2284 = vmatprep.subr.mxu0 0.0
  %2285 = vmatpush1.msra.mxu0 0.0
  %2286 = vmatprep.subr.mxu0 0.0
  %2287 = vmatpush1.msra.mxu0 0.0
  %2288 = vmatprep.subr.mxu0 0.0
  %2289 = vmatpush1.msra.mxu0 0.0
  %2290 = vmatprep.subr.mxu0 0.0
  %2291 = vmatpush1.msra.mxu0 0.0
  %2292 = vmatprep.subr.mxu0 0.0
  %2293 = vmatpush1.msra.mxu0 0.0
  %2294 = vmatprep.subr.mxu0 0.0
  %2295 = vmatpush1.msra.mxu0 0.0
  %2296 = vmatprep.subr.mxu0 0.0
  %2297 = vmatpush1.msra.mxu0 0.0
  %2298 = vmatprep.subr.mxu0 0.0
  %2299 = vmatpush1.msra.mxu0 0.0
  %2300 = vmatprep.subr.mxu0 0.0
  %v2301 = vand.u32 %v2276, 4294901760
  %2302 = vmatpush1.msra.mxu0 %v2301
  %2303 = vmatprep.subr.mxu0 0.0
  %v2304 = vand.u32 %v2261, 4294901760
  %2305 = vmatpush1.msra.mxu0 %v2304
  %2306 = vmatprep.subr.mxu0 0.0
  %v2307 = vand.u32 %v2260, 4294901760
  %2308 = vmatpush1.msra.mxu0 %v2307
  %2309 = vmatprep.subr.mxu0 0.0
  %v2310 = vand.u32 %v2259, 4294901760
  %2311 = vmatpush1.msra.mxu0 %v2310
  %2312 = vmatprep.subr.mxu0 0.0
  %v2313 = vand.u32 %v2258, 4294901760
  %2314 = vmatpush1.msra.mxu0 %v2313
  %2315 = vmatprep.subr.mxu0 0.0
  %2316 = vmatpush2.msra.mxu0 0.0
  %2317 = vmatprep.subr.mxu0 0.0
  %2318 = vmatpush2.msra.mxu0 0.0
  %2319 = vmatprep.subr.mxu0 0.0
  %2320 = vmatpush2.msra.mxu0 0.0
  %2321 = vmatprep.subr.mxu0 0.0
  %2322 = vmatpush2.msra.mxu0 0.0
  %2323 = vmatprep.subr.mxu0 0.0
  %2324 = vmatpush2.msra.mxu0 0.0
  %2325 = vmatprep.subr.mxu0 0.0
  %2326 = vmatpush2.msra.mxu0 0.0
  %2327 = vmatprep.subr.mxu0 0.0
  %2328 = vmatpush2.msra.mxu0 0.0
  %2329 = vmatprep.subr.mxu0 0.0
  %2330 = vmatpush2.msra.mxu0 0.0
  %2331 = vmatprep.subr.mxu0 0.0
  %2332 = vmatpush2.msra.mxu0 0.0
  %2333 = vmatprep.subr.mxu0 0.0
  %2334 = vmatpush2.msra.mxu0 0.0
  %2335 = vmatprep.subr.mxu0 0.0
  %2336 = vmatpush2.msra.mxu0 0.0
  %2337 = vmatprep.subr.mxu0 0.0
  %2338 = vmatpush2.msra.mxu0 0.0
  %2339 = vmatprep.subr.mxu0 0.0
  %2340 = vmatpush2.msra.mxu0 0.0
  %2341 = vmatprep.subr.mxu0 0.0
  %2342 = vmatpush2.msra.mxu0 0.0
  %2343 = vmatprep.subr.mxu0 0.0
  %2344 = vmatpush2.msra.mxu0 0.0
  %2345 = vmatprep.subr.mxu0 0.0
  %2346 = vmatpush2.msra.mxu0 0.0
  %2347 = vmatprep.mubr.f32.mxu0 0.0
  %v2348 = vand.u32 %v2264, 4294901760
  %v2349 = vsub.f32 %v2264, %v2348
  %v2350 = vand.u32 %v2349, 4294901760
  %v2351 = vsub.f32 %v2349, %v2350
  %v2352 = vand.u32 %v2351, 4294901760
  %2353 = vmatmul.mubr.f32.gmra.mxu0 %v2352
  %v2354 = vpop.f32.mrf.mxu0
  %v2355 = vadd.f32 %v2237, %v2354
  %v2356 = vpop.f32.mrf.mxu0
  %2357 = vmatprep.mubr.f32.mxu0 0.0
  %v2358 = vand.u32 %v2267, 4294901760
  %v2359 = vsub.f32 %v2267, %v2358
  %v2360 = vand.u32 %v2359, 4294901760
  %v2361 = vsub.f32 %v2359, %v2360
  %v2362 = vand.u32 %v2361, 4294901760
  %2363 = vmatmul.mubr.f32.gmra.mxu0 %v2362
  %v2364 = vpop.f32.mrf.mxu0
  %v2365 = vadd.f32 %v2243, %v2364
  %v2366 = vpop.f32.mrf.mxu0
  %2367 = vmatprep.mubr.f32.mxu0 0.0
  %v2368 = vand.u32 %v2270, 4294901760
  %v2369 = vsub.f32 %v2270, %v2368
  %v2370 = vand.u32 %v2369, 4294901760
  %v2371 = vsub.f32 %v2369, %v2370
  %v2372 = vand.u32 %v2371, 4294901760
  %2373 = vmatmul.mubr.f32.gmra.mxu0 %v2372
  %v2374 = vpop.f32.mrf.mxu0
  %v2375 = vadd.f32 %v2249, %v2374
  %v2376 = vpop.f32.mrf.mxu0
  %2377 = vmatprep.mubr.f32.mxu0 0.0
  %v2378 = vand.u32 %v2273, 4294901760
  %v2379 = vsub.f32 %v2273, %v2378
  %v2380 = vand.u32 %v2379, 4294901760
  %v2381 = vsub.f32 %v2379, %v2380
  %v2382 = vand.u32 %v2381, 4294901760
  %2383 = vmatmul.mubr.f32.gmra.mxu0 %v2382
  %v2384 = vpop.f32.mrf.mxu0
  %v2385 = vadd.f32 %v2255, %v2384
  %v2386 = vpop.f32.mrf.mxu0
  %2387 = vdwg.mxu0
  %2388 = vmatprep.subr.mxu0 0.0
  %2389 = vmatpush1.msra.mxu0 0.0
  %2390 = vmatprep.subr.mxu0 0.0
  %2391 = vmatpush1.msra.mxu0 0.0
  %2392 = vmatprep.subr.mxu0 0.0
  %2393 = vmatpush1.msra.mxu0 0.0
  %2394 = vmatprep.subr.mxu0 0.0
  %2395 = vmatpush1.msra.mxu0 0.0
  %2396 = vmatprep.subr.mxu0 0.0
  %2397 = vmatpush1.msra.mxu0 0.0
  %2398 = vmatprep.subr.mxu0 0.0
  %2399 = vmatpush1.msra.mxu0 0.0
  %2400 = vmatprep.subr.mxu0 0.0
  %2401 = vmatpush1.msra.mxu0 0.0
  %2402 = vmatprep.subr.mxu0 0.0
  %2403 = vmatpush1.msra.mxu0 0.0
  %2404 = vmatprep.subr.mxu0 0.0
  %2405 = vmatpush1.msra.mxu0 0.0
  %2406 = vmatprep.subr.mxu0 0.0
  %2407 = vmatpush1.msra.mxu0 0.0
  %2408 = vmatprep.subr.mxu0 0.0
  %2409 = vmatpush1.msra.mxu0 0.0
  %2410 = vmatprep.subr.mxu0 0.0
  %v2411 = vand.u32 %v2276, 4294901760
  %v2412 = vsub.f32 %v2276, %v2411
  %v2413 = vand.u32 %v2412, 4294901760
  %v2414 = vsub.f32 %v2412, %v2413
  %v2415 = vand.u32 %v2414, 4294901760
  %2416 = vmatpush1.msra.mxu0 %v2415
  %2417 = vmatprep.subr.mxu0 0.0
  %v2418 = vand.u32 %v2261, 4294901760
  %v2419 = vsub.f32 %v2261, %v2418
  %v2420 = vand.u32 %v2419, 4294901760
  %v2421 = vsub.f32 %v2419, %v2420
  %v2422 = vand.u32 %v2421, 4294901760
  %2423 = vmatpush1.msra.mxu0 %v2422
  %2424 = vmatprep.subr.mxu0 0.0
  %v2425 = vand.u32 %v2260, 4294901760
  %v2426 = vsub.f32 %v2260, %v2425
  %v2427 = vand.u32 %v2426, 4294901760
  %v2428 = vsub.f32 %v2426, %v2427
  %v2429 = vand.u32 %v2428, 4294901760
  %2430 = vmatpush1.msra.mxu0 %v2429
  %2431 = vmatprep.subr.mxu0 0.0
  %v2432 = vand.u32 %v2259, 4294901760
  %v2433 = vsub.f32 %v2259, %v2432
  %v2434 = vand.u32 %v2433, 4294901760
  %v2435 = vsub.f32 %v2433, %v2434
  %v2436 = vand.u32 %v2435, 4294901760
  %2437 = vmatpush1.msra.mxu0 %v2436
  %2438 = vmatprep.subr.mxu0 0.0
  %v2439 = vand.u32 %v2258, 4294901760
  %v2440 = vsub.f32 %v2258, %v2439
  %v2441 = vand.u32 %v2440, 4294901760
  %v2442 = vsub.f32 %v2440, %v2441
  %v2443 = vand.u32 %v2442, 4294901760
  %2444 = vmatpush1.msra.mxu0 %v2443
  %2445 = vmatprep.subr.mxu0 0.0
  %2446 = vmatpush2.msra.mxu0 0.0
  %2447 = vmatprep.subr.mxu0 0.0
  %2448 = vmatpush2.msra.mxu0 0.0
  %2449 = vmatprep.subr.mxu0 0.0
  %2450 = vmatpush2.msra.mxu0 0.0
  %2451 = vmatprep.subr.mxu0 0.0
  %2452 = vmatpush2.msra.mxu0 0.0
  %2453 = vmatprep.subr.mxu0 0.0
  %2454 = vmatpush2.msra.mxu0 0.0
  %2455 = vmatprep.subr.mxu0 0.0
  %2456 = vmatpush2.msra.mxu0 0.0
  %2457 = vmatprep.subr.mxu0 0.0
  %2458 = vmatpush2.msra.mxu0 0.0
  %2459 = vmatprep.subr.mxu0 0.0
  %2460 = vmatpush2.msra.mxu0 0.0
  %2461 = vmatprep.subr.mxu0 0.0
  %2462 = vmatpush2.msra.mxu0 0.0
  %2463 = vmatprep.subr.mxu0 0.0
  %2464 = vmatpush2.msra.mxu0 0.0
  %2465 = vmatprep.subr.mxu0 0.0
  %2466 = vmatpush2.msra.mxu0 0.0
  %2467 = vmatprep.subr.mxu0 0.0
  %2468 = vmatpush2.msra.mxu0 0.0
  %2469 = vmatprep.subr.mxu0 0.0
  %2470 = vmatpush2.msra.mxu0 0.0
  %2471 = vmatprep.subr.mxu0 0.0
  %2472 = vmatpush2.msra.mxu0 0.0
  %2473 = vmatprep.subr.mxu0 0.0
  %2474 = vmatpush2.msra.mxu0 0.0
  %2475 = vmatprep.subr.mxu0 0.0
  %2476 = vmatpush2.msra.mxu0 0.0
  %2477 = vmatprep.mubr.f32.mxu0 0.0
  %v2478 = vand.u32 %v2264, 4294901760
  %2479 = vmatmul.mubr.f32.gmra.mxu0 %v2478
  %v2480 = vpop.f32.mrf.mxu0
  %v2481 = vadd.f32 %v2355, %v2480
  %v2482 = vpop.f32.mrf.mxu0
  %2483 = vmatprep.mubr.f32.mxu0 0.0
  %v2484 = vand.u32 %v2267, 4294901760
  %2485 = vmatmul.mubr.f32.gmra.mxu0 %v2484
  %v2486 = vpop.f32.mrf.mxu0
  %v2487 = vadd.f32 %v2365, %v2486
  %v2488 = vpop.f32.mrf.mxu0
  %2489 = vmatprep.mubr.f32.mxu0 0.0
  %v2490 = vand.u32 %v2270, 4294901760
  %2491 = vmatmul.mubr.f32.gmra.mxu0 %v2490
  %v2492 = vpop.f32.mrf.mxu0
  %v2493 = vadd.f32 %v2375, %v2492
  %v2494 = vpop.f32.mrf.mxu0
  %2495 = vmatprep.mubr.f32.mxu0 0.0
  %v2496 = vand.u32 %v2273, 4294901760
  %2497 = vmatmul.mubr.f32.gmra.mxu0 %v2496
  %v2498 = vpop.f32.mrf.mxu0
  %v2499 = vadd.f32 %v2385, %v2498
  %v2500 = vpop.f32.mrf.mxu0
  %2501 = vdwg.mxu0
  %2502 = vmatprep.subr.mxu0 0.0
  %2503 = vmatpush1.msra.mxu0 0.0
  %2504 = vmatprep.subr.mxu0 0.0
  %2505 = vmatpush1.msra.mxu0 0.0
  %2506 = vmatprep.subr.mxu0 0.0
  %2507 = vmatpush1.msra.mxu0 0.0
  %2508 = vmatprep.subr.mxu0 0.0
  %2509 = vmatpush1.msra.mxu0 0.0
  %2510 = vmatprep.subr.mxu0 0.0
  %2511 = vmatpush1.msra.mxu0 0.0
  %2512 = vmatprep.subr.mxu0 0.0
  %2513 = vmatpush1.msra.mxu0 0.0
  %2514 = vmatprep.subr.mxu0 0.0
  %2515 = vmatpush1.msra.mxu0 0.0
  %2516 = vmatprep.subr.mxu0 0.0
  %2517 = vmatpush1.msra.mxu0 0.0
  %2518 = vmatprep.subr.mxu0 0.0
  %2519 = vmatpush1.msra.mxu0 0.0
  %2520 = vmatprep.subr.mxu0 0.0
  %2521 = vmatpush1.msra.mxu0 0.0
  %2522 = vmatprep.subr.mxu0 0.0
  %2523 = vmatpush1.msra.mxu0 0.0
  %2524 = vmatprep.subr.mxu0 0.0
  %v2525 = vand.u32 %v2276, 4294901760
  %v2526 = vsub.f32 %v2276, %v2525
  %2527 = vmatpush1.msra.mxu0 %v2526
  %2528 = vmatprep.subr.mxu0 0.0
  %v2529 = vand.u32 %v2261, 4294901760
  %v2530 = vsub.f32 %v2261, %v2529
  %2531 = vmatpush1.msra.mxu0 %v2530
  %2532 = vmatprep.subr.mxu0 0.0
  %v2533 = vand.u32 %v2260, 4294901760
  %v2534 = vsub.f32 %v2260, %v2533
  %2535 = vmatpush1.msra.mxu0 %v2534
  %2536 = vmatprep.subr.mxu0 0.0
  %v2537 = vand.u32 %v2259, 4294901760
  %v2538 = vsub.f32 %v2259, %v2537
  %2539 = vmatpush1.msra.mxu0 %v2538
  %2540 = vmatprep.subr.mxu0 0.0
  %v2541 = vand.u32 %v2258, 4294901760
  %v2542 = vsub.f32 %v2258, %v2541
  %2543 = vmatpush1.msra.mxu0 %v2542
  %2544 = vmatprep.subr.mxu0 0.0
  %2545 = vmatpush2.msra.mxu0 0.0
  %2546 = vmatprep.subr.mxu0 0.0
  %2547 = vmatpush2.msra.mxu0 0.0
  %2548 = vmatprep.subr.mxu0 0.0
  %2549 = vmatpush2.msra.mxu0 0.0
  %2550 = vmatprep.subr.mxu0 0.0
  %2551 = vmatpush2.msra.mxu0 0.0
  %2552 = vmatprep.subr.mxu0 0.0
  %2553 = vmatpush2.msra.mxu0 0.0
  %2554 = vmatprep.subr.mxu0 0.0
  %2555 = vmatpush2.msra.mxu0 0.0
  %2556 = vmatprep.subr.mxu0 0.0
  %2557 = vmatpush2.msra.mxu0 0.0
  %2558 = vmatprep.subr.mxu0 0.0
  %2559 = vmatpush2.msra.mxu0 0.0
  %2560 = vmatprep.subr.mxu0 0.0
  %2561 = vmatpush2.msra.mxu0 0.0
  %2562 = vmatprep.subr.mxu0 0.0
  %2563 = vmatpush2.msra.mxu0 0.0
  %2564 = vmatprep.subr.mxu0 0.0
  %2565 = vmatpush2.msra.mxu0 0.0
  %2566 = vmatprep.subr.mxu0 0.0
  %2567 = vmatpush2.msra.mxu0 0.0
  %2568 = vmatprep.subr.mxu0 0.0
  %2569 = vmatpush2.msra.mxu0 0.0
  %2570 = vmatprep.subr.mxu0 0.0
  %2571 = vmatpush2.msra.mxu0 0.0
  %2572 = vmatprep.subr.mxu0 0.0
  %2573 = vmatpush2.msra.mxu0 0.0
  %2574 = vmatprep.subr.mxu0 0.0
  %2575 = vmatpush2.msra.mxu0 0.0
  %2576 = vmatprep.mubr.f32.mxu0 0.0
  %v2577 = vand.u32 %v2264, 4294901760
  %v2578 = vsub.f32 %v2264, %v2577
  %2579 = vmatmul.mubr.f32.gmra.mxu0 %v2578
  %v2580 = vpop.f32.mrf.mxu0
  %v2581 = vadd.f32 %v2481, %v2580
  %v2582 = vpop.f32.mrf.mxu0
  %2583 = vmatprep.mubr.f32.mxu0 0.0
  %v2584 = vand.u32 %v2267, 4294901760
  %v2585 = vsub.f32 %v2267, %v2584
  %2586 = vmatmul.mubr.f32.gmra.mxu0 %v2585
  %v2587 = vpop.f32.mrf.mxu0
  %v2588 = vadd.f32 %v2487, %v2587
  %v2589 = vpop.f32.mrf.mxu0
  %2590 = vmatprep.mubr.f32.mxu0 0.0
  %v2591 = vand.u32 %v2270, 4294901760
  %v2592 = vsub.f32 %v2270, %v2591
  %2593 = vmatmul.mubr.f32.gmra.mxu0 %v2592
  %v2594 = vpop.f32.mrf.mxu0
  %v2595 = vadd.f32 %v2493, %v2594
  %v2596 = vpop.f32.mrf.mxu0
  %2597 = vmatprep.mubr.f32.mxu0 0.0
  %v2598 = vand.u32 %v2273, 4294901760
  %v2599 = vsub.f32 %v2273, %v2598
  %2600 = vmatmul.mubr.f32.gmra.mxu0 %v2599
  %v2601 = vpop.f32.mrf.mxu0
  %v2602 = vadd.f32 %v2499, %v2601
  %v2603 = vpop.f32.mrf.mxu0
  %2604 = vdwg.mxu0
  %2605 = vmatprep.subr.mxu0 0.0
  %2606 = vmatpush1.msra.mxu0 0.0
  %2607 = vmatprep.subr.mxu0 0.0
  %2608 = vmatpush1.msra.mxu0 0.0
  %2609 = vmatprep.subr.mxu0 0.0
  %2610 = vmatpush1.msra.mxu0 0.0
  %2611 = vmatprep.subr.mxu0 0.0
  %2612 = vmatpush1.msra.mxu0 0.0
  %2613 = vmatprep.subr.mxu0 0.0
  %2614 = vmatpush1.msra.mxu0 0.0
  %2615 = vmatprep.subr.mxu0 0.0
  %2616 = vmatpush1.msra.mxu0 0.0
  %2617 = vmatprep.subr.mxu0 0.0
  %2618 = vmatpush1.msra.mxu0 0.0
  %2619 = vmatprep.subr.mxu0 0.0
  %2620 = vmatpush1.msra.mxu0 0.0
  %2621 = vmatprep.subr.mxu0 0.0
  %2622 = vmatpush1.msra.mxu0 0.0
  %2623 = vmatprep.subr.mxu0 0.0
  %2624 = vmatpush1.msra.mxu0 0.0
  %2625 = vmatprep.subr.mxu0 0.0
  %2626 = vmatpush1.msra.mxu0 0.0
  %2627 = vmatprep.subr.mxu0 0.0
  %v2628 = vand.u32 %v2276, 4294901760
  %2629 = vmatpush1.msra.mxu0 %v2628
  %2630 = vmatprep.subr.mxu0 0.0
  %v2631 = vand.u32 %v2261, 4294901760
  %2632 = vmatpush1.msra.mxu0 %v2631
  %2633 = vmatprep.subr.mxu0 0.0
  %v2634 = vand.u32 %v2260, 4294901760
  %2635 = vmatpush1.msra.mxu0 %v2634
  %2636 = vmatprep.subr.mxu0 0.0
  %v2637 = vand.u32 %v2259, 4294901760
  %2638 = vmatpush1.msra.mxu0 %v2637
  %2639 = vmatprep.subr.mxu0 0.0
  %v2640 = vand.u32 %v2258, 4294901760
  %2641 = vmatpush1.msra.mxu0 %v2640
  %2642 = vmatprep.subr.mxu0 0.0
  %2643 = vmatpush2.msra.mxu0 0.0
  %2644 = vmatprep.subr.mxu0 0.0
  %2645 = vmatpush2.msra.mxu0 0.0
  %2646 = vmatprep.subr.mxu0 0.0
  %2647 = vmatpush2.msra.mxu0 0.0
  %2648 = vmatprep.subr.mxu0 0.0
  %2649 = vmatpush2.msra.mxu0 0.0
  %2650 = vmatprep.subr.mxu0 0.0
  %2651 = vmatpush2.msra.mxu0 0.0
  %2652 = vmatprep.subr.mxu0 0.0
  %2653 = vmatpush2.msra.mxu0 0.0
  %2654 = vmatprep.subr.mxu0 0.0
  %2655 = vmatpush2.msra.mxu0 0.0
  %2656 = vmatprep.subr.mxu0 0.0
  %2657 = vmatpush2.msra.mxu0 0.0
  %2658 = vmatprep.subr.mxu0 0.0
  %2659 = vmatpush2.msra.mxu0 0.0
  %2660 = vmatprep.subr.mxu0 0.0
  %2661 = vmatpush2.msra.mxu0 0.0
  %2662 = vmatprep.subr.mxu0 0.0
  %2663 = vmatpush2.msra.mxu0 0.0
  %2664 = vmatprep.subr.mxu0 0.0
  %2665 = vmatpush2.msra.mxu0 0.0
  %2666 = vmatprep.subr.mxu0 0.0
  %2667 = vmatpush2.msra.mxu0 0.0
  %2668 = vmatprep.subr.mxu0 0.0
  %2669 = vmatpush2.msra.mxu0 0.0
  %2670 = vmatprep.subr.mxu0 0.0
  %2671 = vmatpush2.msra.mxu0 0.0
  %2672 = vmatprep.subr.mxu0 0.0
  %2673 = vmatpush2.msra.mxu0 0.0
  %2674 = vmatprep.mubr.f32.mxu0 0.0
  %v2675 = vand.u32 %v2264, 4294901760
  %v2676 = vsub.f32 %v2264, %v2675
  %v2677 = vand.u32 %v2676, 4294901760
  %2678 = vmatmul.mubr.f32.gmra.mxu0 %v2677
  %v2679 = vpop.f32.mrf.mxu0
  %v2680 = vadd.f32 %v2581, %v2679
  %v2681 = vpop.f32.mrf.mxu0
  %2682 = vmatprep.mubr.f32.mxu0 0.0
  %v2683 = vand.u32 %v2267, 4294901760
  %v2684 = vsub.f32 %v2267, %v2683
  %v2685 = vand.u32 %v2684, 4294901760
  %2686 = vmatmul.mubr.f32.gmra.mxu0 %v2685
  %v2687 = vpop.f32.mrf.mxu0
  %v2688 = vadd.f32 %v2588, %v2687
  %v2689 = vpop.f32.mrf.mxu0
  %2690 = vmatprep.mubr.f32.mxu0 0.0
  %v2691 = vand.u32 %v2270, 4294901760
  %v2692 = vsub.f32 %v2270, %v2691
  %v2693 = vand.u32 %v2692, 4294901760
  %2694 = vmatmul.mubr.f32.gmra.mxu0 %v2693
  %v2695 = vpop.f32.mrf.mxu0
  %v2696 = vadd.f32 %v2595, %v2695
  %v2697 = vpop.f32.mrf.mxu0
  %2698 = vmatprep.mubr.f32.mxu0 0.0
  %v2699 = vand.u32 %v2273, 4294901760
  %v2700 = vsub.f32 %v2273, %v2699
  %v2701 = vand.u32 %v2700, 4294901760
  %2702 = vmatmul.mubr.f32.gmra.mxu0 %v2701
  %v2703 = vpop.f32.mrf.mxu0
  %v2704 = vadd.f32 %v2602, %v2703
  %v2705 = vpop.f32.mrf.mxu0
  %2706 = vdwg.mxu0
  %2707 = vmatprep.subr.mxu0 0.0
  %2708 = vmatpush1.msra.mxu0 0.0
  %2709 = vmatprep.subr.mxu0 0.0
  %2710 = vmatpush1.msra.mxu0 0.0
  %2711 = vmatprep.subr.mxu0 0.0
  %2712 = vmatpush1.msra.mxu0 0.0
  %2713 = vmatprep.subr.mxu0 0.0
  %2714 = vmatpush1.msra.mxu0 0.0
  %2715 = vmatprep.subr.mxu0 0.0
  %2716 = vmatpush1.msra.mxu0 0.0
  %2717 = vmatprep.subr.mxu0 0.0
  %2718 = vmatpush1.msra.mxu0 0.0
  %2719 = vmatprep.subr.mxu0 0.0
  %2720 = vmatpush1.msra.mxu0 0.0
  %2721 = vmatprep.subr.mxu0 0.0
  %2722 = vmatpush1.msra.mxu0 0.0
  %2723 = vmatprep.subr.mxu0 0.0
  %2724 = vmatpush1.msra.mxu0 0.0
  %2725 = vmatprep.subr.mxu0 0.0
  %2726 = vmatpush1.msra.mxu0 0.0
  %2727 = vmatprep.subr.mxu0 0.0
  %2728 = vmatpush1.msra.mxu0 0.0
  %2729 = vmatprep.subr.mxu0 0.0
  %v2730 = vand.u32 %v2276, 4294901760
  %v2731 = vsub.f32 %v2276, %v2730
  %v2732 = vand.u32 %v2731, 4294901760
  %2733 = vmatpush1.msra.mxu0 %v2732
  %2734 = vmatprep.subr.mxu0 0.0
  %v2735 = vand.u32 %v2261, 4294901760
  %v2736 = vsub.f32 %v2261, %v2735
  %v2737 = vand.u32 %v2736, 4294901760
  %2738 = vmatpush1.msra.mxu0 %v2737
  %2739 = vmatprep.subr.mxu0 0.0
  %v2740 = vand.u32 %v2260, 4294901760
  %v2741 = vsub.f32 %v2260, %v2740
  %v2742 = vand.u32 %v2741, 4294901760
  %2743 = vmatpush1.msra.mxu0 %v2742
  %2744 = vmatprep.subr.mxu0 0.0
  %v2745 = vand.u32 %v2259, 4294901760
  %v2746 = vsub.f32 %v2259, %v2745
  %v2747 = vand.u32 %v2746, 4294901760
  %2748 = vmatpush1.msra.mxu0 %v2747
  %2749 = vmatprep.subr.mxu0 0.0
  %v2750 = vand.u32 %v2258, 4294901760
  %v2751 = vsub.f32 %v2258, %v2750
  %v2752 = vand.u32 %v2751, 4294901760
  %2753 = vmatpush1.msra.mxu0 %v2752
  %2754 = vmatprep.subr.mxu0 0.0
  %2755 = vmatpush2.msra.mxu0 0.0
  %2756 = vmatprep.subr.mxu0 0.0
  %2757 = vmatpush2.msra.mxu0 0.0
  %2758 = vmatprep.subr.mxu0 0.0
  %2759 = vmatpush2.msra.mxu0 0.0
  %2760 = vmatprep.subr.mxu0 0.0
  %2761 = vmatpush2.msra.mxu0 0.0
  %2762 = vmatprep.subr.mxu0 0.0
  %2763 = vmatpush2.msra.mxu0 0.0
  %2764 = vmatprep.subr.mxu0 0.0
  %2765 = vmatpush2.msra.mxu0 0.0
  %2766 = vmatprep.subr.mxu0 0.0
  %2767 = vmatpush2.msra.mxu0 0.0
  %2768 = vmatprep.subr.mxu0 0.0
  %2769 = vmatpush2.msra.mxu0 0.0
  %2770 = vmatprep.subr.mxu0 0.0
  %2771 = vmatpush2.msra.mxu0 0.0
  %2772 = vmatprep.subr.mxu0 0.0
  %2773 = vmatpush2.msra.mxu0 0.0
  %2774 = vmatprep.subr.mxu0 0.0
  %2775 = vmatpush2.msra.mxu0 0.0
  %2776 = vmatprep.subr.mxu0 0.0
  %2777 = vmatpush2.msra.mxu0 0.0
  %2778 = vmatprep.subr.mxu0 0.0
  %2779 = vmatpush2.msra.mxu0 0.0
  %2780 = vmatprep.subr.mxu0 0.0
  %2781 = vmatpush2.msra.mxu0 0.0
  %2782 = vmatprep.subr.mxu0 0.0
  %2783 = vmatpush2.msra.mxu0 0.0
  %2784 = vmatprep.subr.mxu0 0.0
  %2785 = vmatpush2.msra.mxu0 0.0
  %2786 = vmatprep.mubr.f32.mxu0 0.0
  %v2787 = vand.u32 %v2264, 4294901760
  %2788 = vmatmul.mubr.f32.gmra.mxu0 %v2787
  %v2789 = vpop.f32.mrf.mxu0
  %v2790 = vadd.f32 %v2680, %v2789
  %v2791 = vpop.f32.mrf.mxu0
  %2792 = vmatprep.mubr.f32.mxu0 0.0
  %v2793 = vand.u32 %v2267, 4294901760
  %2794 = vmatmul.mubr.f32.gmra.mxu0 %v2793
  %v2795 = vpop.f32.mrf.mxu0
  %v2796 = vadd.f32 %v2688, %v2795
  %v2797 = vpop.f32.mrf.mxu0
  %2798 = vmatprep.mubr.f32.mxu0 0.0
  %v2799 = vand.u32 %v2270, 4294901760
  %2800 = vmatmul.mubr.f32.gmra.mxu0 %v2799
  %v2801 = vpop.f32.mrf.mxu0
  %v2802 = vadd.f32 %v2696, %v2801
  %v2803 = vpop.f32.mrf.mxu0
  %2804 = vmatprep.mubr.f32.mxu0 0.0
  %v2805 = vand.u32 %v2273, 4294901760
  %2806 = vmatmul.mubr.f32.gmra.mxu0 %v2805
  %v2807 = vpop.f32.mrf.mxu0
  %v2808 = vadd.f32 %v2704, %v2807
  %v2809 = vpop.f32.mrf.mxu0
  %2810 = vdwg.mxu0
  %2811 = vmatprep.subr.mxu0 0.0
  %2812 = vmatpush1.msra.mxu0 0.0
  %2813 = vmatprep.subr.mxu0 0.0
  %2814 = vmatpush1.msra.mxu0 0.0
  %2815 = vmatprep.subr.mxu0 0.0
  %2816 = vmatpush1.msra.mxu0 0.0
  %2817 = vmatprep.subr.mxu0 0.0
  %2818 = vmatpush1.msra.mxu0 0.0
  %2819 = vmatprep.subr.mxu0 0.0
  %2820 = vmatpush1.msra.mxu0 0.0
  %2821 = vmatprep.subr.mxu0 0.0
  %2822 = vmatpush1.msra.mxu0 0.0
  %2823 = vmatprep.subr.mxu0 0.0
  %2824 = vmatpush1.msra.mxu0 0.0
  %2825 = vmatprep.subr.mxu0 0.0
  %2826 = vmatpush1.msra.mxu0 0.0
  %2827 = vmatprep.subr.mxu0 0.0
  %2828 = vmatpush1.msra.mxu0 0.0
  %2829 = vmatprep.subr.mxu0 0.0
  %2830 = vmatpush1.msra.mxu0 0.0
  %2831 = vmatprep.subr.mxu0 0.0
  %2832 = vmatpush1.msra.mxu0 0.0
  %2833 = vmatprep.subr.mxu0 0.0
  %v2834 = vand.u32 %v2276, 4294901760
  %2835 = vmatpush1.msra.mxu0 %v2834
  %2836 = vmatprep.subr.mxu0 0.0
  %v2837 = vand.u32 %v2261, 4294901760
  %2838 = vmatpush1.msra.mxu0 %v2837
  %2839 = vmatprep.subr.mxu0 0.0
  %v2840 = vand.u32 %v2260, 4294901760
  %2841 = vmatpush1.msra.mxu0 %v2840
  %2842 = vmatprep.subr.mxu0 0.0
  %v2843 = vand.u32 %v2259, 4294901760
  %2844 = vmatpush1.msra.mxu0 %v2843
  %2845 = vmatprep.subr.mxu0 0.0
  %v2846 = vand.u32 %v2258, 4294901760
  %2847 = vmatpush1.msra.mxu0 %v2846
  %2848 = vmatprep.subr.mxu0 0.0
  %2849 = vmatpush2.msra.mxu0 0.0
  %2850 = vmatprep.subr.mxu0 0.0
  %2851 = vmatpush2.msra.mxu0 0.0
  %2852 = vmatprep.subr.mxu0 0.0
  %2853 = vmatpush2.msra.mxu0 0.0
  %2854 = vmatprep.subr.mxu0 0.0
  %2855 = vmatpush2.msra.mxu0 0.0
  %2856 = vmatprep.subr.mxu0 0.0
  %2857 = vmatpush2.msra.mxu0 0.0
  %2858 = vmatprep.subr.mxu0 0.0
  %2859 = vmatpush2.msra.mxu0 0.0
  %2860 = vmatprep.subr.mxu0 0.0
  %2861 = vmatpush2.msra.mxu0 0.0
  %2862 = vmatprep.subr.mxu0 0.0
  %2863 = vmatpush2.msra.mxu0 0.0
  %2864 = vmatprep.subr.mxu0 0.0
  %2865 = vmatpush2.msra.mxu0 0.0
  %2866 = vmatprep.subr.mxu0 0.0
  %2867 = vmatpush2.msra.mxu0 0.0
  %2868 = vmatprep.subr.mxu0 0.0
  %2869 = vmatpush2.msra.mxu0 0.0
  %2870 = vmatprep.subr.mxu0 0.0
  %2871 = vmatpush2.msra.mxu0 0.0
  %2872 = vmatprep.subr.mxu0 0.0
  %2873 = vmatpush2.msra.mxu0 0.0
  %2874 = vmatprep.subr.mxu0 0.0
  %2875 = vmatpush2.msra.mxu0 0.0
  %2876 = vmatprep.subr.mxu0 0.0
  %2877 = vmatpush2.msra.mxu0 0.0
  %2878 = vmatprep.subr.mxu0 0.0
  %2879 = vmatpush2.msra.mxu0 0.0
  %2880 = vmatprep.mubr.f32.mxu0 0.0
  %v2881 = vand.u32 %v2264, 4294901760
  %2882 = vmatmul.mubr.f32.gmra.mxu0 %v2881
  %v2883 = vpop.f32.mrf.mxu0
  %v2884 = vadd.f32 %v2790, %v2883
  %v2885 = vpop.f32.mrf.mxu0
  %2886 = vmatprep.mubr.f32.mxu0 0.0
  %v2887 = vand.u32 %v2267, 4294901760
  %2888 = vmatmul.mubr.f32.gmra.mxu0 %v2887
  %v2889 = vpop.f32.mrf.mxu0
  %v2890 = vadd.f32 %v2796, %v2889
  %v2891 = vpop.f32.mrf.mxu0
  %2892 = vmatprep.mubr.f32.mxu0 0.0
  %v2893 = vand.u32 %v2270, 4294901760
  %2894 = vmatmul.mubr.f32.gmra.mxu0 %v2893
  %v2895 = vpop.f32.mrf.mxu0
  %v2896 = vadd.f32 %v2802, %v2895
  %v2897 = vpop.f32.mrf.mxu0
  %2898 = vmatprep.mubr.f32.mxu0 0.0
  %v2899 = vand.u32 %v2273, 4294901760
  %2900 = vmatmul.mubr.f32.gmra.mxu0 %v2899
  %v2901 = vpop.f32.mrf.mxu0
  %v2902 = vadd.f32 %v2808, %v2901
  %v2903 = vpop.f32.mrf.mxu0
  %2904 = vdwg.mxu0
  %v2905 = vadd.f32 %v2884, %v1584
  %v2906 = vadd.f32 %v2890, %v1590
  %v2907 = vadd.f32 %v2896, %v1596
  %v2908 = vadd.f32 %v2902, %v1602
  %v2909 = vstv %s28
  %v2910 = vadd.f32 %v2905, %v2909
  %v2911 = vadd.f32 %v2906, %v2909
  %v2912 = vadd.f32 %v2907, %v2909
  %v2913 = vadd.f32 %v2908, %v2909
  %vm2914 = vcmask 31744
  %2915 = vst.msk [vmem:[%s6] sm:$0xff] %vm2914, %v2910
  %2916 = vst.msk [vmem:[%s6 + $0x8] sm:$0xff] %vm2914, %v2911
  %2917 = vst.msk [vmem:[%s6 + $0x10] sm:$0xff] %vm2914, %v2912
  %2918 = vst.msk [vmem:[%s6 + $0x18] sm:$0xff] %vm2914, %v2913
  // Predicated region
  $region26: #{tpu_custom_call.1} parent=0 // pred_check
    _
  $region27: #{tpu_custom_call.1} parent=0 // pred_check_branch
    %2920 = sbr.rel (0) target = $region29
  $region28: #{tpu_custom_call.1} parent=0 // pred_region
    _
  $region29: #{tpu_custom_call.1} parent=0 // pred_fallthru
    _
  // Predicated region
  $region30: #{tpu_custom_call.1} parent=0 // pred_check
    _
  $region31: #{tpu_custom_call.1} parent=0 // pred_check_branch
    %2922 = sbr.rel (0) target = $region33
  $region32: #{tpu_custom_call.1} parent=0 // pred_region
    _
  $region33: #{tpu_custom_call.1} parent=0 // pred_fallthru
    _

</llo_original>
